<compile_context>
chip_gen: v7x
topology: tpu7x:2x2x1
jax: 0.10.0
libtpu: 0.0.40
codegen_flags: <defaults>
</compile_context>

<pallas_src>
import functools

import jax
import jax.numpy as jnp
from jax.experimental import pallas as pl
from jax.experimental.pallas import tpu as pltpu


# ----------------------------- fused Pallas kernel -----------------------------

def _loss_kernel(rcat_ref, tvec_ref, pts_ref,
                 gt_c_ref, pred_c_ref, gt_m_ref, pred_m_ref,
                 out_ref,
                 num_acc, den_acc, mabs_acc,
                 *, inv_mask_count):
    s = pl.program_id(1)
    ns = pl.num_programs(1)

    @pl.when(s == 0)
    def _init():
        num_acc[...] = jnp.zeros_like(num_acc)
        den_acc[...] = jnp.zeros_like(den_acc)
        mabs_acc[...] = jnp.zeros_like(mabs_acc)

    # ---- streamed geo tile (HBM-bandwidth-bound part) -------------------------
    # Inputs arrive in their native dtype; upcast right after the loads and keep
    # all arithmetic / accumulation in f32.
    gm = gt_m_ref[...].astype(jnp.float32)                 # (NB, TS)
    gt_c = gt_c_ref[...].astype(jnp.float32)               # (NB, C, TS)
    pr_c = pred_c_ref[...].astype(jnp.float32)             # (NB, C, TS)

    # mask is channel-independent: sum |diff| over channels first, multiply once
    absdiff_c = jnp.sum(jnp.abs(pr_c - gt_c), axis=1)      # (NB, TS)
    num_acc[...] += jnp.sum(absdiff_c * gm, axis=-1, keepdims=True)
    den_acc[...] += jnp.sum(gm, axis=-1, keepdims=True)

    pm = pred_m_ref[...].astype(jnp.float32)                # (NB, TS)
    # conditional_clamp(pred, gt, l0=0, u1=1) for binary gt masks
    pm_cl = jnp.where(gm > 0.5, jnp.minimum(pm, 1.0), jnp.maximum(pm, 0.0))
    mabs_acc[...] += jnp.sum(jnp.abs(pm_cl - gm), axis=-1, keepdims=True)

    # ---- epilogue: tiny pose math + finalize, once per batch block ------------
    @pl.when(s == ns - 1)
    def _finalize():
        rcat = rcat_ref[...].astype(jnp.float32)            # (NB, 3, 6) = [pred_R | gt_R]
        dR = rcat[:, :, 0:3] - rcat[:, :, 3:6]              # (NB, 3, 3)
        pts = pts_ref[...].astype(jnp.float32)              # (NB, 3, M), M on lanes
        # 3x3 @ 3xM contraction on the VPU (MXU would waste >95% of a tile at K=3);
        # runs once per batch block, hidden under the geo DMA stream.
        prod = (dR[:, :, 0:1] * pts[:, 0:1, :] +
                dR[:, :, 1:2] * pts[:, 1:2, :] +
                dR[:, :, 2:3] * pts[:, 2:3, :])              # (NB, 3, M)
        l1 = jnp.sum(jnp.abs(prod), axis=1)                  # (NB, M)

        tv = tvec_ref[...].astype(jnp.float32)               # (NB, 8) = [pred_t|gt_t|1/d|0]
        inv_diam = tv[:, 6:7]                                # (NB, 1)
        pm_loss = jnp.mean(l1, axis=-1, keepdims=True) * inv_diam

        dt = jnp.abs(tv[:, 0:3] - tv[:, 3:6])                # (NB, 3)
        tc = dt[:, 0:1] + dt[:, 1:2]                         # (NB, 1)
        td = dt[:, 2:3]                                      # (NB, 1)

        # NOTE: matches the module exactly (no epsilon) -> NaN for a sample whose
        # gt mask is entirely empty, same as the PyTorch reference.
        coord = num_acc[...] / den_acc[...]                  # (NB, 1)
        mask_l = mabs_acc[...] * inv_mask_count              # (NB, 1)

        # direct lane-slot stores (no lane-axis concatenate in the epilogue)
        out_ref[:, 0:1] = pm_loss
        out_ref[:, 1:2] = tc
        out_ref[:, 2:3] = td
        out_ref[:, 3:4] = coord
        out_ref[:, 4:5] = mask_l
        out_ref[:, 5:8] = jnp.zeros((out_ref.shape[0], 3), out_ref.dtype)


# ----------------------------- sizing helpers -----------------------------

def _round_up(x, m):
    return -(-x // m) * m


def _sublane_tile(dtype):
    # native sublane tile: 8 for 4-byte, 16 for 2-byte, 32 for 1-byte dtypes
    return max(8, 32 // jnp.dtype(dtype).itemsize)


def _padded_vmem_bytes(block_shape, dtype):
    """VMEM bytes of ONE buffer for a block, accounting for (sublane, lane) padding."""
    itemsize = jnp.dtype(dtype).itemsize
    shape = tuple(int(d) for d in block_shape)
    if len(shape) == 1:
        shape = (1,) + shape
    lead = 1
    for d in shape[:-2]:
        lead *= d
    return (lead * _round_up(shape[-2], _sublane_tile(dtype))
            * _round_up(shape[-1], 128) * itemsize)


def _default_lane_cap():
    # v7x: ~2.3x the HBM BW of v6e but the same ~0.35us per-grid-step overhead,
    # so stream bigger tiles per step.  Best-effort detection; 8192 elsewhere
    # keeps the double-buffered footprint well inside v5e's 16 MiB scoped default.
    try:
        kind = jax.devices()[0].device_kind.lower()
    except Exception:
        return 8192
    return 16384 if "v7" in kind else 8192


def _pick_lane_tile(S, cap):
    """Largest power-of-two multiple of 128 that divides S (capped); else full row."""
    if S % 128 != 0:
        return S
    ts = 128
    while ts * 2 <= cap and S % (ts * 2) == 0:
        ts *= 2
    return ts


def _pick_batch_block(N, min_sublane):
    # NB must be a multiple of the strictest native sublane tile among the
    # 2-D-blocked arrays (8 f32 / 16 bf16 / 32 int8) or equal the full batch.
    # Prefer grid[0] >= 2 so both v7x TensorCores get work on the parallel axis.
    if N % min_sublane == 0 and N // min_sublane >= 2:
        return min_sublane
    return N


# ----------------------------- pallas_call wrapper -----------------------------

def fused_loss(r_cat, t_vec, pts_nm3, gt_c, pred_c, gt_m, pred_m,
               *, lane_tile=None, batch_block=None):
    """All pose + geo losses in one pipelined pallas_call. Returns (N, 8) f32:
       [:,0]=pm, [:,1]=t_center, [:,2]=t_depth, [:,3]=coord_3d, [:,4]=mask_L1."""
    N, C, S = gt_c.shape
    M = pts_nm3.shape[-1]

    min_sub = max(_sublane_tile(gt_m.dtype), _sublane_tile(pred_m.dtype))
    NB = batch_block if batch_block is not None else _pick_batch_block(N, min_sub)
    assert N % NB == 0 and (NB % min_sub == 0 or NB == N), "bad batch block"
    TS = lane_tile if lane_tile is not None else _pick_lane_tile(S, _default_lane_cap())
    assert S % TS == 0 and (TS % 128 == 0 or TS == S), "lane tile must be 128-aligned"

    grid = (N // NB, S // TS)
    kernel = functools.partial(_loss_kernel, inv_mask_count=1.0 / float(S))

    # padded, double-buffered VMEM footprint (coords pad C=3 -> 8/16 sublanes)
    streamed = 2 * (_padded_vmem_bytes((NB, C, TS), gt_c.dtype)
                    + _padded_vmem_bytes((NB, C, TS), pred_c.dtype)
                    + _padded_vmem_bytes((NB, TS), gt_m.dtype)
                    + _padded_vmem_bytes((NB, TS), pred_m.dtype))
    small = 2 * (_padded_vmem_bytes((NB, 3, 6), r_cat.dtype)
                 + _padded_vmem_bytes((NB, 8), t_vec.dtype)
                 + _padded_vmem_bytes((NB, 3, M), pts_nm3.dtype)
                 + _padded_vmem_bytes((NB, 8), jnp.float32))
    vmem_limit = int(min(max(streamed + small + (16 << 20), 32 << 20), 48 << 20))

    out = pl.pallas_call(
        kernel,
        out_shape=jax.ShapeDtypeStruct((N, 8), jnp.float32),
        grid_spec=pltpu.PrefetchScalarGridSpec(
            num_scalar_prefetch=0,
            grid=grid,
            in_specs=[
                # pose inputs: tiny, indexed by batch block only (no re-DMA across s)
                pl.BlockSpec((NB, 3, 6), lambda i, s: (i, 0, 0)),    # [pred_R | gt_R]
                pl.BlockSpec((NB, 8),    lambda i, s: (i, 0)),       # [pred_t|gt_t|1/d|0]
                pl.BlockSpec((NB, 3, M), lambda i, s: (i, 0, 0)),    # mesh points
                # geo inputs: streamed spatial tiles, native dtype, double-buffered
                pl.BlockSpec((NB, C, TS), lambda i, s: (i, 0, s)),   # gt_coord
                pl.BlockSpec((NB, C, TS), lambda i, s: (i, 0, s)),   # pred_coord
                pl.BlockSpec((NB, TS),    lambda i, s: (i, s)),      # gt_mask (dense)
                pl.BlockSpec((NB, TS),    lambda i, s: (i, s)),      # pred_mask (dense)
            ],
            out_specs=pl.BlockSpec((NB, 8), lambda i, s: (i, 0)),
            scratch_shapes=[pltpu.VMEM((NB, 1), jnp.float32),        # coord numerator
                            pltpu.VMEM((NB, 1), jnp.float32),        # mask area
                            pltpu.VMEM((NB, 1), jnp.float32)],       # mask |.| sum
        ),
        compiler_params=pltpu.CompilerParams(
            dimension_semantics=("parallel", "arbitrary"),
            vmem_limit_bytes=vmem_limit),
    )(r_cat, t_vec, pts_nm3, gt_c, pred_c, gt_m, pred_m)
    return out


def loss_forward(obj_id, obj_points, obj_diam,
                 gt_R, pred_R, gt_t, pred_t,
                 gt_coord, pred_coord, gt_mask, pred_mask,
                 mean=True, lane_tile=None, batch_block=None):
    """Equivalent of Loss.forward with pose=True, geo=True."""
    N, C, H, W = gt_coord.shape
    S = H * W

    # glue: per-sample gather of mesh points / diameters (replaces the python
    # loop over objects_eval in pm_loss). Assumes a fixed M points per object.
    # TODO(synk): objects with varying (zero-padded) point counts would bias the
    #             per-point mean; a per-object valid-point count would be needed.
    pts_nm3 = jnp.transpose(obj_points[obj_id], (0, 2, 1)).astype(jnp.float32)  # (N,3,M)
    inv_diam = (1.0 / obj_diam[obj_id]).astype(jnp.float32)                     # (N,)

    # pose-side packing: 6 tiny inputs -> 3 (fewer per-block DMA descriptors)
    r_cat = jnp.concatenate([pred_R.astype(jnp.float32),
                             gt_R.astype(jnp.float32)], axis=-1)                # (N,3,6)
    t_vec = jnp.concatenate([pred_t.astype(jnp.float32),
                             gt_t.astype(jnp.float32),
                             inv_diam[:, None],
                             jnp.zeros((N, 1), jnp.float32)], axis=-1)          # (N,8)

    # geo: free reshapes only — native dtype, NO wrapper-side f32 cast pass
    gt_c = gt_coord.reshape(N, C, S)
    pred_c = pred_coord.reshape(N, C, S)
    gt_m = gt_mask.reshape(N, S)
    pred_m = pred_mask.reshape(N, S)
    if gt_m.dtype == jnp.bool_:
        gt_m = gt_m.astype(pred_m.dtype)

    out = fused_loss(r_cat, t_vec, pts_nm3, gt_c, pred_c, gt_m, pred_m,
                     lane_tile=lane_tile, batch_block=batch_block)

    losses = [out[:, 0], out[:, 1], out[:, 2], out[:, 3], out[:, 4]]
    if mean:
        losses = [l.mean() for l in losses]
    return losses


# ----------------------------- reference (pure JAX) -----------------------------

def loss_forward_ref(obj_id, obj_points, obj_diam,
                     gt_R, pred_R, gt_t, pred_t,
                     gt_coord, pred_coord, gt_mask, pred_mask):
    dR = pred_R - gt_R
    pts = obj_points[obj_id]                                   # (N, M, 3)
    dist = jnp.einsum('nij,nmj->nmi', dR, pts)                 # (N, M, 3)
    pm = jnp.abs(dist).sum(-1).mean(-1) / obj_diam[obj_id]
    tc = jnp.abs(pred_t[:, :2] - gt_t[:, :2]).sum(-1)
    td = jnp.abs(pred_t[:, 2] - gt_t[:, 2])
    num = jnp.abs((pred_coord - gt_coord) * gt_mask).sum((-3, -2, -1))
    den = gt_mask.sum((-3, -2, -1))
    coord = num / den
    pm_cl = jnp.where(gt_mask > 0.5, jnp.minimum(pred_mask, 1.0),
                      jnp.maximum(pred_mask, 0.0))
    mask_l = jnp.abs(pm_cl - gt_mask).mean((-3, -2, -1))
    return [x.mean() for x in (pm, tc, td, coord, mask_l)]


# ----------------------------- main -----------------------------

if __name__ == "__main__":
    key = jax.random.PRNGKey(0)
    N, H, W, M, NUM_OBJ = 16, 32, 32, 128, 3

    keys = jax.random.split(key, 10)

    # deterministic synthetic "objects_eval": mesh points + diameters
    obj_points = 0.05 * jax.random.normal(keys[0], (NUM_OBJ, M, 3), jnp.float32)
    diff = obj_points[:, :, None, :] - obj_points[:, None, :, :]
    obj_diam = jnp.sqrt((diff ** 2).sum(-1)).max(axis=(1, 2))            # (NUM_OBJ,)

    obj_id = jax.random.randint(keys[1], (N,), 0, NUM_OBJ)

    # rotations via QR of random matrices (deterministic)
    gt_R, _ = jnp.linalg.qr(jax.random.normal(keys[2], (N, 3, 3), jnp.float32))
    pred_R, _ = jnp.linalg.qr(jax.random.normal(keys[3], (N, 3, 3), jnp.float32))
    gt_R = gt_R.astype(jnp.float32)
    pred_R = pred_R.astype(jnp.float32)

    gt_t = jax.random.normal(keys[4], (N, 3), jnp.float32)
    pred_t = gt_t + 0.1 * jax.random.normal(keys[5], (N, 3), jnp.float32)

    gt_coord = jax.random.uniform(keys[6], (N, 3, H, W), jnp.float32)
    pred_coord = gt_coord + 0.05 * jax.random.normal(keys[7], (N, 3, H, W), jnp.float32)

    gt_mask = (jax.random.uniform(keys[8], (N, 1, H, W)) > 0.4).astype(jnp.float32)
    pred_mask = jax.random.uniform(keys[9], (N, 1, H, W), jnp.float32,
                                   minval=-0.2, maxval=1.2)

    ref = loss_forward_ref(obj_id, obj_points, obj_diam,
                           gt_R, pred_R, gt_t, pred_t,
                           gt_coord, pred_coord, gt_mask, pred_mask)

    # f32 inputs: default single spatial tile, and a forced multi-tile spatial
    # reduction to exercise the pl.when init/finalize accumulation path.
    for lane_tile in (None, 256):
        got = loss_forward(obj_id, obj_points, obj_diam,
                           gt_R, pred_R, gt_t, pred_t,
                           gt_coord, pred_coord, gt_mask, pred_mask,
                           mean=True, lane_tile=lane_tile)
        got = [jax.block_until_ready(g) for g in got]
        for g, w in zip(got, ref):
            assert jnp.allclose(g, w, rtol=1e-5, atol=1e-5), (lane_tile, g, w)

    # bf16 geo inputs streamed natively (upcast happens inside the kernel)
    gt_coord_b = gt_coord.astype(jnp.bfloat16)
    pred_coord_b = pred_coord.astype(jnp.bfloat16)
    gt_mask_b = gt_mask.astype(jnp.bfloat16)
    pred_mask_b = pred_mask.astype(jnp.bfloat16)
    ref_b = loss_forward_ref(obj_id, obj_points, obj_diam,
                             gt_R, pred_R, gt_t, pred_t,
                             gt_coord_b.astype(jnp.float32),
                             pred_coord_b.astype(jnp.float32),
                             gt_mask_b.astype(jnp.float32),
                             pred_mask_b.astype(jnp.float32))
    got_b = loss_forward(obj_id, obj_points, obj_diam,
                         gt_R, pred_R, gt_t, pred_t,
                         gt_coord_b, pred_coord_b, gt_mask_b, pred_mask_b,
                         mean=True)
    got_b = [jax.block_until_ready(g) for g in got_b]
    for g, w in zip(got_b, ref_b):
        assert jnp.allclose(g, w, rtol=1e-4, atol=1e-4), (g, w)

    print("KERNEL_OK")
</pallas_src>

<mosaic_0001>
module attributes {stable_mosaic.version = 11 : i64} {
  func.func @_loss_kernel(%arg0: i32, %arg1: i32, %arg2: memref<8x3x6xf32, #tpu.memory_space<vmem>>, %arg3: memref<8x8xf32, #tpu.memory_space<vmem>>, %arg4: memref<8x3x128xf32, #tpu.memory_space<vmem>>, %arg5: memref<8x3x1024xf32, #tpu.memory_space<vmem>>, %arg6: memref<8x3x1024xf32, #tpu.memory_space<vmem>>, %arg7: memref<8x1024xf32, #tpu.memory_space<vmem>>, %arg8: memref<8x1024xf32, #tpu.memory_space<vmem>>, %arg9: memref<8x8xf32, #tpu.memory_space<vmem>>, %arg10: memref<8x1xf32, #tpu.memory_space<vmem>>, %arg11: memref<8x1xf32, #tpu.memory_space<vmem>>, %arg12: memref<8x1xf32, #tpu.memory_space<vmem>>) attributes {dimension_semantics = [#tpu.dimension_semantics<parallel>, #tpu.dimension_semantics<arbitrary>], iteration_bounds = array<i64: 2, 1>, scalar_prefetch = 0 : i64, scratch_operands = 3 : i64, tpu.core_type = #tpu.core_type<tc>, window_params = [{transform_indices = @transform_0, window_bounds = array<i64: 8, 3, 6>}, {transform_indices = @transform_1, window_bounds = array<i64: 8, 8>}, {transform_indices = @transform_2, window_bounds = array<i64: 8, 3, 128>}, {transform_indices = @transform_3, window_bounds = array<i64: 8, 3, 1024>}, {transform_indices = @transform_4, window_bounds = array<i64: 8, 3, 1024>}, {transform_indices = @transform_5, window_bounds = array<i64: 8, 1024>}, {transform_indices = @transform_6, window_bounds = array<i64: 8, 1024>}, {transform_indices = @transform_7, window_bounds = array<i64: 8, 8>}]} {
    %c0_i32 = arith.constant 0 : i32
    %0 = arith.cmpi eq, %arg1, %c0_i32 : i32
    %1 = arith.extui %0 : i1 to i32
    %c0_i32_0 = arith.constant 0 : i32
    %2 = arith.cmpi ne, %1, %c0_i32_0 : i32
    scf.if %2 {
      %cst_30 = arith.constant 0.000000e+00 : f32
      %38 = vector.broadcast %cst_30 : f32 to vector<8x1xf32>
      %c0_31 = arith.constant 0 : index
      %c0_32 = arith.constant 0 : index
      %39 = vector.load %arg10[%c0_31, %c0_32] : memref<8x1xf32, #tpu.memory_space<vmem>>, vector<8x1xf32>
      tpu.vector_store %arg10[%c0_31, %c0_32], %38 {strides = array<i32>} : memref<8x1xf32, #tpu.memory_space<vmem>>, vector<8x1xf32>,
      %cst_33 = arith.constant 0.000000e+00 : f32
      %40 = vector.broadcast %cst_33 : f32 to vector<8x1xf32>
      %c0_34 = arith.constant 0 : index
      %c0_35 = arith.constant 0 : index
      %41 = vector.load %arg11[%c0_34, %c0_35] : memref<8x1xf32, #tpu.memory_space<vmem>>, vector<8x1xf32>
      tpu.vector_store %arg11[%c0_34, %c0_35], %40 {strides = array<i32>} : memref<8x1xf32, #tpu.memory_space<vmem>>, vector<8x1xf32>,
      %cst_36 = arith.constant 0.000000e+00 : f32
      %42 = vector.broadcast %cst_36 : f32 to vector<8x1xf32>
      %c0_37 = arith.constant 0 : index
      %c0_38 = arith.constant 0 : index
      %43 = vector.load %arg12[%c0_37, %c0_38] : memref<8x1xf32, #tpu.memory_space<vmem>>, vector<8x1xf32>
      tpu.vector_store %arg12[%c0_37, %c0_38], %42 {strides = array<i32>} : memref<8x1xf32, #tpu.memory_space<vmem>>, vector<8x1xf32>,
    } else {
    }
    %c0 = arith.constant 0 : index
    %c0_1 = arith.constant 0 : index
    %3 = vector.load %arg7[%c0, %c0_1] : memref<8x1024xf32, #tpu.memory_space<vmem>>, vector<8x1024xf32>
    %c0_2 = arith.constant 0 : index
    %c0_3 = arith.constant 0 : index
    %c0_4 = arith.constant 0 : index
    %4 = vector.load %arg5[%c0_2, %c0_3, %c0_4] : memref<8x3x1024xf32, #tpu.memory_space<vmem>>, vector<8x3x1024xf32>
    %c0_5 = arith.constant 0 : index
    %c0_6 = arith.constant 0 : index
    %c0_7 = arith.constant 0 : index
    %5 = vector.load %arg6[%c0_5, %c0_6, %c0_7] : memref<8x3x1024xf32, #tpu.memory_space<vmem>>, vector<8x3x1024xf32>
    %6 = arith.subf %5, %4 : vector<8x3x1024xf32>
    %7 = math.absf %6 : vector<8x3x1024xf32>
    %cst = arith.constant dense<0.000000e+00> : vector<8x1024xf32>
    %8 = vector.multi_reduction <add>, %7, %cst [1] : vector<8x3x1024xf32> to vector<8x1024xf32>
    %c0_8 = arith.constant 0 : index
    %c0_9 = arith.constant 0 : index
    %9 = vector.load %arg10[%c0_8, %c0_9] : memref<8x1xf32, #tpu.memory_space<vmem>>, vector<8x1xf32>
    %10 = arith.mulf %8, %3 : vector<8x1024xf32>
    %cst_10 = arith.constant dense<0.000000e+00> : vector<8xf32>
    %11 = vector.multi_reduction <add>, %10, %cst_10 [1] : vector<8x1024xf32> to vector<8xf32>
    %12 = vector.shape_cast %11 : vector<8xf32> to vector<8x1xf32>
    %13 = arith.addf %9, %12 : vector<8x1xf32>
    %c0_11 = arith.constant 0 : index
    %c0_12 = arith.constant 0 : index
    %14 = vector.load %arg10[%c0_11, %c0_12] : memref<8x1xf32, #tpu.memory_space<vmem>>, vector<8x1xf32>
    tpu.vector_store %arg10[%c0_11, %c0_12], %13 {strides = array<i32>} : memref<8x1xf32, #tpu.memory_space<vmem>>, vector<8x1xf32>,
    %c0_13 = arith.constant 0 : index
    %c0_14 = arith.constant 0 : index
    %15 = vector.load %arg11[%c0_13, %c0_14] : memref<8x1xf32, #tpu.memory_space<vmem>>, vector<8x1xf32>
    %cst_15 = arith.constant dense<0.000000e+00> : vector<8xf32>
    %16 = vector.multi_reduction <add>, %3, %cst_15 [1] : vector<8x1024xf32> to vector<8xf32>
    %17 = vector.shape_cast %16 : vector<8xf32> to vector<8x1xf32>
    %18 = arith.addf %15, %17 : vector<8x1xf32>
    %c0_16 = arith.constant 0 : index
    %c0_17 = arith.constant 0 : index
    %19 = vector.load %arg11[%c0_16, %c0_17] : memref<8x1xf32, #tpu.memory_space<vmem>>, vector<8x1xf32>
    tpu.vector_store %arg11[%c0_16, %c0_17], %18 {strides = array<i32>} : memref<8x1xf32, #tpu.memory_space<vmem>>, vector<8x1xf32>,
    %c0_18 = arith.constant 0 : index
    %c0_19 = arith.constant 0 : index
    %20 = vector.load %arg8[%c0_18, %c0_19] : memref<8x1024xf32, #tpu.memory_space<vmem>>, vector<8x1024xf32>
    %cst_20 = arith.constant 5.000000e-01 : f32
    %21 = vector.broadcast %cst_20 : f32 to vector<8x1024xf32>
    %22 = arith.cmpf ogt, %3, %21 : vector<8x1024xf32>
    %cst_21 = arith.constant 1.000000e+00 : f32
    %23 = vector.broadcast %cst_21 : f32 to vector<8x1024xf32>
    %24 = arith.minimumf %20, %23 : vector<8x1024xf32>
    %cst_22 = arith.constant 0.000000e+00 : f32
    %25 = vector.broadcast %cst_22 : f32 to vector<8x1024xf32>
    %26 = arith.maximumf %20, %25 : vector<8x1024xf32>
    %27 = arith.select %22, %24, %26 : vector<8x1024xi1>, vector<8x1024xf32>
    %c0_23 = arith.constant 0 : index
    %c0_24 = arith.constant 0 : index
    %28 = vector.load %arg12[%c0_23, %c0_24] : memref<8x1xf32, #tpu.memory_space<vmem>>, vector<8x1xf32>
    %29 = arith.subf %27, %3 : vector<8x1024xf32>
    %30 = math.absf %29 : vector<8x1024xf32>
    %cst_25 = arith.constant dense<0.000000e+00> : vector<8xf32>
    %31 = vector.multi_reduction <add>, %30, %cst_25 [1] : vector<8x1024xf32> to vector<8xf32>
    %32 = vector.shape_cast %31 : vector<8xf32> to vector<8x1xf32>
    %33 = arith.addf %28, %32 : vector<8x1xf32>
    %c0_26 = arith.constant 0 : index
    %c0_27 = arith.constant 0 : index
    %34 = vector.load %arg12[%c0_26, %c0_27] : memref<8x1xf32, #tpu.memory_space<vmem>>, vector<8x1xf32>
    tpu.vector_store %arg12[%c0_26, %c0_27], %33 {strides = array<i32>} : memref<8x1xf32, #tpu.memory_space<vmem>>, vector<8x1xf32>,
    %c0_i32_28 = arith.constant 0 : i32
    %35 = arith.cmpi eq, %arg1, %c0_i32_28 : i32
    %36 = arith.extui %35 : i1 to i32
    %c0_i32_29 = arith.constant 0 : i32
    %37 = arith.cmpi ne, %36, %c0_i32_29 : i32
    scf.if %37 {
      %c0_30 = arith.constant 0 : index
      %c0_31 = arith.constant 0 : index
      %c0_32 = arith.constant 0 : index
      %38 = vector.load %arg2[%c0_30, %c0_31, %c0_32] : memref<8x3x6xf32, #tpu.memory_space<vmem>>, vector<8x3x6xf32>
      %39 = vector.extract_strided_slice %38 {offsets = [0, 0, 0], sizes = [8, 3, 3], strides = [1, 1, 1]} : vector<8x3x6xf32> to vector<8x3x3xf32>
      %40 = vector.extract_strided_slice %38 {offsets = [0, 0, 3], sizes = [8, 3, 3], strides = [1, 1, 1]} : vector<8x3x6xf32> to vector<8x3x3xf32>
      %41 = arith.subf %39, %40 : vector<8x3x3xf32>
      %c0_33 = arith.constant 0 : index
      %c0_34 = arith.constant 0 : index
      %c0_35 = arith.constant 0 : index
      %42 = vector.load %arg4[%c0_33, %c0_34, %c0_35] : memref<8x3x128xf32, #tpu.memory_space<vmem>>, vector<8x3x128xf32>
      %43 = vector.extract_strided_slice %41 {offsets = [0, 0, 0], sizes = [8, 3, 1], strides = [1, 1, 1]} : vector<8x3x3xf32> to vector<8x3x1xf32>
      %44 = vector.extract_strided_slice %42 {offsets = [0, 0, 0], sizes = [8, 1, 128], strides = [1, 1, 1]} : vector<8x3x128xf32> to vector<8x1x128xf32>
      %45 = vector.broadcast %43 : vector<8x3x1xf32> to vector<8x3x128xf32>
      %46 = vector.broadcast %44 : vector<8x1x128xf32> to vector<8x3x128xf32>
      %47 = arith.mulf %45, %46 : vector<8x3x128xf32>
      %48 = vector.extract_strided_slice %41 {offsets = [0, 0, 1], sizes = [8, 3, 1], strides = [1, 1, 1]} : vector<8x3x3xf32> to vector<8x3x1xf32>
      %49 = vector.extract_strided_slice %42 {offsets = [0, 1, 0], sizes = [8, 1, 128], strides = [1, 1, 1]} : vector<8x3x128xf32> to vector<8x1x128xf32>
      %50 = vector.broadcast %48 : vector<8x3x1xf32> to vector<8x3x128xf32>
      %51 = vector.broadcast %49 : vector<8x1x128xf32> to vector<8x3x128xf32>
      %52 = arith.mulf %50, %51 : vector<8x3x128xf32>
      %53 = arith.addf %47, %52 : vector<8x3x128xf32>
      %54 = vector.extract_strided_slice %41 {offsets = [0, 0, 2], sizes = [8, 3, 1], strides = [1, 1, 1]} : vector<8x3x3xf32> to vector<8x3x1xf32>
      %55 = vector.extract_strided_slice %42 {offsets = [0, 2, 0], sizes = [8, 1, 128], strides = [1, 1, 1]} : vector<8x3x128xf32> to vector<8x1x128xf32>
      %56 = vector.broadcast %54 : vector<8x3x1xf32> to vector<8x3x128xf32>
      %57 = vector.broadcast %55 : vector<8x1x128xf32> to vector<8x3x128xf32>
      %58 = arith.mulf %56, %57 : vector<8x3x128xf32>
      %59 = arith.addf %53, %58 : vector<8x3x128xf32>
      %60 = math.absf %59 : vector<8x3x128xf32>
      %cst_36 = arith.constant dense<0.000000e+00> : vector<8x128xf32>
      %61 = vector.multi_reduction <add>, %60, %cst_36 [1] : vector<8x3x128xf32> to vector<8x128xf32>
      %c0_37 = arith.constant 0 : index
      %c0_38 = arith.constant 0 : index
      %62 = vector.load %arg3[%c0_37, %c0_38] : memref<8x8xf32, #tpu.memory_space<vmem>>, vector<8x8xf32>
      %63 = vector.extract_strided_slice %62 {offsets = [0, 6], sizes = [8, 1], strides = [1, 1]} : vector<8x8xf32> to vector<8x1xf32>
      %cst_39 = arith.constant dense<0.000000e+00> : vector<8xf32>
      %64 = vector.multi_reduction <add>, %61, %cst_39 [1] : vector<8x128xf32> to vector<8xf32>
      %65 = vector.shape_cast %64 : vector<8xf32> to vector<8x1xf32>
      %cst_40 = arith.constant 1.280000e+02 : f32
      %66 = vector.broadcast %cst_40 : f32 to vector<8x1xf32>
      %67 = arith.divf %65, %66 : vector<8x1xf32>
      %68 = arith.mulf %67, %63 : vector<8x1xf32>
      %69 = vector.extract_strided_slice %62 {offsets = [0, 0], sizes = [8, 3], strides = [1, 1]} : vector<8x8xf32> to vector<8x3xf32>
      %70 = vector.extract_strided_slice %62 {offsets = [0, 3], sizes = [8, 3], strides = [1, 1]} : vector<8x8xf32> to vector<8x3xf32>
      %71 = arith.subf %69, %70 : vector<8x3xf32>
      %72 = math.absf %71 : vector<8x3xf32>
      %73 = vector.extract_strided_slice %72 {offsets = [0, 0], sizes = [8, 1], strides = [1, 1]} : vector<8x3xf32> to vector<8x1xf32>
      %74 = vector.extract_strided_slice %72 {offsets = [0, 1], sizes = [8, 1], strides = [1, 1]} : vector<8x3xf32> to vector<8x1xf32>
      %75 = arith.addf %73, %74 : vector<8x1xf32>
      %76 = vector.extract_strided_slice %72 {offsets = [0, 2], sizes = [8, 1], strides = [1, 1]} : vector<8x3xf32> to vector<8x1xf32>
      %c0_41 = arith.constant 0 : index
      %c0_42 = arith.constant 0 : index
      %77 = vector.load %arg10[%c0_41, %c0_42] : memref<8x1xf32, #tpu.memory_space<vmem>>, vector<8x1xf32>
      %c0_43 = arith.constant 0 : index
      %c0_44 = arith.constant 0 : index
      %78 = vector.load %arg11[%c0_43, %c0_44] : memref<8x1xf32, #tpu.memory_space<vmem>>, vector<8x1xf32>
      %79 = arith.divf %77, %78 : vector<8x1xf32>
      %c0_45 = arith.constant 0 : index
      %c0_46 = arith.constant 0 : index
      %80 = vector.load %arg12[%c0_45, %c0_46] : memref<8x1xf32, #tpu.memory_space<vmem>>, vector<8x1xf32>
      %cst_47 = arith.constant 9.765625E-4 : f32
      %81 = vector.broadcast %cst_47 : f32 to vector<8x1xf32>
      %82 = arith.mulf %80, %81 : vector<8x1xf32>
      %c0_48 = arith.constant 0 : index
      %c0_49 = arith.constant 0 : index
      %83 = vector.load %arg9[%c0_48, %c0_49] : memref<8x8xf32, #tpu.memory_space<vmem>>, vector<8x1xf32>
      tpu.vector_store %arg9[%c0_48, %c0_49], %68 {strides = array<i32>} : memref<8x8xf32, #tpu.memory_space<vmem>>, vector<8x1xf32>,
      %c0_50 = arith.constant 0 : index
      %c1 = arith.constant 1 : index
      %84 = vector.load %arg9[%c0_50, %c1] : memref<8x8xf32, #tpu.memory_space<vmem>>, vector<8x1xf32>
      tpu.vector_store %arg9[%c0_50, %c1], %75 {strides = array<i32>} : memref<8x8xf32, #tpu.memory_space<vmem>>, vector<8x1xf32>,
      %c0_51 = arith.constant 0 : index
      %c2 = arith.constant 2 : index
      %85 = vector.load %arg9[%c0_51, %c2] : memref<8x8xf32, #tpu.memory_space<vmem>>, vector<8x1xf32>
      tpu.vector_store %arg9[%c0_51, %c2], %76 {strides = array<i32>} : memref<8x8xf32, #tpu.memory_space<vmem>>, vector<8x1xf32>,
      %c0_52 = arith.constant 0 : index
      %c3 = arith.constant 3 : index
      %86 = vector.load %arg9[%c0_52, %c3] : memref<8x8xf32, #tpu.memory_space<vmem>>, vector<8x1xf32>
      tpu.vector_store %arg9[%c0_52, %c3], %79 {strides = array<i32>} : memref<8x8xf32, #tpu.memory_space<vmem>>, vector<8x1xf32>,
      %c0_53 = arith.constant 0 : index
      %c4 = arith.constant 4 : index
      %87 = vector.load %arg9[%c0_53, %c4] : memref<8x8xf32, #tpu.memory_space<vmem>>, vector<8x1xf32>
      tpu.vector_store %arg9[%c0_53, %c4], %82 {strides = array<i32>} : memref<8x8xf32, #tpu.memory_space<vmem>>, vector<8x1xf32>,
      %cst_54 = arith.constant 0.000000e+00 : f32
      %88 = vector.broadcast %cst_54 : f32 to vector<8x3xf32>
      %c0_55 = arith.constant 0 : index
      %c5 = arith.constant 5 : index
      %89 = vector.load %arg9[%c0_55, %c5] : memref<8x8xf32, #tpu.memory_space<vmem>>, vector<8x3xf32>
      tpu.vector_store %arg9[%c0_55, %c5], %88 {strides = array<i32>} : memref<8x8xf32, #tpu.memory_space<vmem>>, vector<8x3xf32>,
    } else {
    }
    return
  }
  func.func @transform_0(%arg0: i32, %arg1: i32) -> (i32, i32, i32) {
    %c0_i32 = arith.constant 0 : i32
    %c0_i32_0 = arith.constant 0 : i32
    %c0_i32_1 = arith.constant 0 : i32
    return %arg0, %c0_i32, %c0_i32_0 : i32, i32, i32
  }
  func.func @transform_1(%arg0: i32, %arg1: i32) -> (i32, i32) {
    %c0_i32 = arith.constant 0 : i32
    %c0_i32_0 = arith.constant 0 : i32
    return %arg0, %c0_i32 : i32, i32
  }
  func.func @transform_2(%arg0: i32, %arg1: i32) -> (i32, i32, i32) {
    %c0_i32 = arith.constant 0 : i32
    %c0_i32_0 = arith.constant 0 : i32
    %c0_i32_1 = arith.constant 0 : i32
    return %arg0, %c0_i32, %c0_i32_0 : i32, i32, i32
  }
  func.func @transform_3(%arg0: i32, %arg1: i32) -> (i32, i32, i32) {
    %c0_i32 = arith.constant 0 : i32
    %c0_i32_0 = arith.constant 0 : i32
    return %arg0, %c0_i32, %arg1 : i32, i32, i32
  }
  func.func @transform_4(%arg0: i32, %arg1: i32) -> (i32, i32, i32) {
    %c0_i32 = arith.constant 0 : i32
    %c0_i32_0 = arith.constant 0 : i32
    return %arg0, %c0_i32, %arg1 : i32, i32, i32
  }
  func.func @transform_5(%arg0: i32, %arg1: i32) -> (i32, i32) {
    %c0_i32 = arith.constant 0 : i32
    return %arg0, %arg1 : i32, i32
  }
  func.func @transform_6(%arg0: i32, %arg1: i32) -> (i32, i32) {
    %c0_i32 = arith.constant 0 : i32
    return %arg0, %arg1 : i32, i32
  }
  func.func @transform_7(%arg0: i32, %arg1: i32) -> (i32, i32) {
    %c0_i32 = arith.constant 0 : i32
    %c0_i32_0 = arith.constant 0 : i32
    return %arg0, %c0_i32 : i32, i32
  }
}

</mosaic_0001>

<llo_original>
// kernel: tpu_custom_call.1
$region0: #{tpu_custom_call.1}
  #allocation0 [shape = 'u32[]', space=smem, size = 0x4, offset = 0x4, fixed_abs, tag = 'smem constant byte address 0x4 - core index']
  #allocation1 [shape = 'u32[144,128]{1,0:T(1,128)}', space=vmem, size = 0x12000, scoped, tag = 'internal scratch']
  #allocation2 [shape = 'f32[8,1]{1,0:T(8,128)}', space=vmem, size = 0x1000, scoped, tag = 'scratch operand']
  #allocation3 [shape = 'f32[8,1]{1,0:T(8,128)}', space=vmem, size = 0x1000, scoped, tag = 'scratch operand']
  #allocation4 [shape = 'f32[8,1]{1,0:T(8,128)}', space=vmem, size = 0x1000, scoped, tag = 'scratch operand']
  %s0 = inlined_call_operand.vmem [shape: f32[16,3,6], index: 0, kind: input, shape index: {}]
  %s1 = inlined_call_operand.vmem [shape: f32[16,8], index: 1, kind: input, shape index: {}]
  %s2 = inlined_call_operand.vmem [shape: f32[16,3,128], index: 2, kind: input, shape index: {}]
  %s3 = inlined_call_operand.vmem [shape: f32[16,3,1024], index: 3, kind: input, shape index: {}]
  %s4 = inlined_call_operand.vmem [shape: f32[16,3,1024], index: 4, kind: input, shape index: {}]
  %s5 = inlined_call_operand.vmem [shape: f32[16,1024], index: 5, kind: input, shape index: {}]
  %s6 = inlined_call_operand.vmem [shape: f32[16,1024], index: 6, kind: input, shape index: {}]
  %s7 = inlined_call_operand.vmem [shape: f32[16,8], index: 7, kind: output, shape index: {}]
  %s8 = sld [smem:[#allocation0]]
  $region69: #{tpu_custom_call.1} parent=0
    _
  %s10 = ssub.s32 1, %s8
  %s11 = scalar_select 0, %s10, %s8
  loop: start=0, step=1, limit=4
  $region2: #{tpu_custom_call.1} parent=0 // loop_pre_header
    _
  $region3: #{tpu_custom_call.1} parent=0 // loop_header
    %s13 = sphi 0, %s17
    %p14 = scmp.ge.s32.totalorder %s13, 4
    %s20 = sphi 0, %s32
    %s21 = sphi 0, %s28
    %s22 = sphi 0, %s20
    %s23 = sphi 0, %s21
    %s24 = sphi 0, %s22
    %s25 = sphi 0, %s23
    %s35 = sphi 0, %s37
    %s38 = sphi 0, %s35
    %s39 = sphi 0, %s38
    %s55 = sphi 0, %s39
    %s61 = sphi 0, %s63
    %s64 = sphi 0, %s61
    %s65 = sphi 0, %s64
    %s81 = sphi 0, %s65
    %s87 = sphi 0, %s89
    %s90 = sphi 0, %s87
    %s91 = sphi 0, %s90
    %s107 = sphi 0, %s91
    %s115 = sphi 0, %s117
    %s118 = sphi 0, %s115
    %s119 = sphi 0, %s118
    %s135 = sphi 0, %s119
    %s143 = sphi 0, %s145
    %s146 = sphi 0, %s143
    %s147 = sphi 0, %s146
    %s163 = sphi 0, %s147
    %s171 = sphi 0, %s173
    %s174 = sphi 0, %s171
    %s175 = sphi 0, %s174
    %s191 = sphi 0, %s175
    %s199 = sphi 0, %s201
    %s202 = sphi 0, %s199
    %s203 = sphi 0, %s202
    %s219 = sphi 0, %s203
    %s225 = sphi 0, %s227
    %s228 = sphi 0, %s225
    %s229 = sphi 0, %s228
    %s245 = sphi 0, %s229
  $region4: #{tpu_custom_call.1} parent=0 // loop_header_branch
    %16 = sbr.rel (%p14) target = $region8
  $region5: #{tpu_custom_call.1} parent=0 // loop_body
    %s18 = ssub.s32 %s13, 1
    %s19 = ssub.s32 %s13, 2
    %s26 = sadd.s32 1, %s21
    %p27 = scmp.ge.s32.totalorder %s26, 1
    %s28 = scalar_select %p27, 0, %s26
    %s29 = sadd.s32 1, %s20
    %s30 = scalar_select %p27, %s29, %s20
    %p31 = scmp.ge.s32.totalorder %s30, 2
    %s32 = scalar_select %p31, 0, %s30
    %s33 = ssub.s32 %s20, %s32
    %p34 = scmp.eq.s32.totalorder %s33, 0
    %s36 = sadd.s32 %s35, 1
    %s37 = scalar_select %p34, %s35, %s36
    %p40 = pneg %p34
    %p41 = scmp.eq.s32.totalorder %s13, 1
    %p42 = por %p40, %p41
    %p43 = scmp.ne.s32.totalorder %s35, %s38
    %p44 = scmp.eq.s32.totalorder %s13, 0
    %p45 = por %p43, %p44
    %p46 = scmp.ne.s32.totalorder %s35, %s38
    %p47 = scmp.eq.s32.totalorder %s18, 1
    %p48 = por %p46, %p47
    %p49 = scmp.ne.s32.totalorder %s38, %s39
    %p50 = scmp.eq.s32.totalorder %s18, 0
    %p51 = por %p49, %p50
    %p52 = scmp.ne.s32.totalorder %s38, %s39
    %p53 = scmp.eq.s32.totalorder %s19, 1
    %p54 = por %p52, %p53
    %p56 = scmp.ne.s32.totalorder %s39, %s55
    %p57 = scmp.eq.s32.totalorder %s19, 0
    %p58 = por %p56, %p57
    %s59 = ssub.s32 %s20, %s32
    %p60 = scmp.eq.s32.totalorder %s59, 0
    %s62 = sadd.s32 %s61, 1
    %s63 = scalar_select %p60, %s61, %s62
    %p66 = pneg %p60
    %p67 = scmp.eq.s32.totalorder %s13, 1
    %p68 = por %p66, %p67
    %p69 = scmp.ne.s32.totalorder %s61, %s64
    %p70 = scmp.eq.s32.totalorder %s13, 0
    %p71 = por %p69, %p70
    %p72 = scmp.ne.s32.totalorder %s61, %s64
    %p73 = scmp.eq.s32.totalorder %s18, 1
    %p74 = por %p72, %p73
    %p75 = scmp.ne.s32.totalorder %s64, %s65
    %p76 = scmp.eq.s32.totalorder %s18, 0
    %p77 = por %p75, %p76
    %p78 = scmp.ne.s32.totalorder %s64, %s65
    %p79 = scmp.eq.s32.totalorder %s19, 1
    %p80 = por %p78, %p79
    %p82 = scmp.ne.s32.totalorder %s65, %s81
    %p83 = scmp.eq.s32.totalorder %s19, 0
    %p84 = por %p82, %p83
    %s85 = ssub.s32 %s20, %s32
    %p86 = scmp.eq.s32.totalorder %s85, 0
    %s88 = sadd.s32 %s87, 1
    %s89 = scalar_select %p86, %s87, %s88
    %p92 = pneg %p86
    %p93 = scmp.eq.s32.totalorder %s13, 1
    %p94 = por %p92, %p93
    %p95 = scmp.ne.s32.totalorder %s87, %s90
    %p96 = scmp.eq.s32.totalorder %s13, 0
    %p97 = por %p95, %p96
    %p98 = scmp.ne.s32.totalorder %s87, %s90
    %p99 = scmp.eq.s32.totalorder %s18, 1
    %p100 = por %p98, %p99
    %p101 = scmp.ne.s32.totalorder %s90, %s91
    %p102 = scmp.eq.s32.totalorder %s18, 0
    %p103 = por %p101, %p102
    %p104 = scmp.ne.s32.totalorder %s90, %s91
    %p105 = scmp.eq.s32.totalorder %s19, 1
    %p106 = por %p104, %p105
    %p108 = scmp.ne.s32.totalorder %s91, %s107
    %p109 = scmp.eq.s32.totalorder %s19, 0
    %p110 = por %p108, %p109
    %s111 = ssub.s32 %s20, %s32
    %s112 = ssub.s32 %s21, %s28
    %s113 = sor.u32 %s111, %s112
    %p114 = scmp.eq.s32.totalorder %s113, 0
    %s116 = sadd.s32 %s115, 1
    %s117 = scalar_select %p114, %s115, %s116
    %p120 = pneg %p114
    %p121 = scmp.eq.s32.totalorder %s13, 1
    %p122 = por %p120, %p121
    %p123 = scmp.ne.s32.totalorder %s115, %s118
    %p124 = scmp.eq.s32.totalorder %s13, 0
    %p125 = por %p123, %p124
    %p126 = scmp.ne.s32.totalorder %s115, %s118
    %p127 = scmp.eq.s32.totalorder %s18, 1
    %p128 = por %p126, %p127
    %p129 = scmp.ne.s32.totalorder %s118, %s119
    %p130 = scmp.eq.s32.totalorder %s18, 0
    %p131 = por %p129, %p130
    %p132 = scmp.ne.s32.totalorder %s118, %s119
    %p133 = scmp.eq.s32.totalorder %s19, 1
    %p134 = por %p132, %p133
    %p136 = scmp.ne.s32.totalorder %s119, %s135
    %p137 = scmp.eq.s32.totalorder %s19, 0
    %p138 = por %p136, %p137
    %s139 = ssub.s32 %s20, %s32
    %s140 = ssub.s32 %s21, %s28
    %s141 = sor.u32 %s139, %s140
    %p142 = scmp.eq.s32.totalorder %s141, 0
    %s144 = sadd.s32 %s143, 1
    %s145 = scalar_select %p142, %s143, %s144
    %p148 = pneg %p142
    %p149 = scmp.eq.s32.totalorder %s13, 1
    %p150 = por %p148, %p149
    %p151 = scmp.ne.s32.totalorder %s143, %s146
    %p152 = scmp.eq.s32.totalorder %s13, 0
    %p153 = por %p151, %p152
    %p154 = scmp.ne.s32.totalorder %s143, %s146
    %p155 = scmp.eq.s32.totalorder %s18, 1
    %p156 = por %p154, %p155
    %p157 = scmp.ne.s32.totalorder %s146, %s147
    %p158 = scmp.eq.s32.totalorder %s18, 0
    %p159 = por %p157, %p158
    %p160 = scmp.ne.s32.totalorder %s146, %s147
    %p161 = scmp.eq.s32.totalorder %s19, 1
    %p162 = por %p160, %p161
    %p164 = scmp.ne.s32.totalorder %s147, %s163
    %p165 = scmp.eq.s32.totalorder %s19, 0
    %p166 = por %p164, %p165
    %s167 = ssub.s32 %s20, %s32
    %s168 = ssub.s32 %s21, %s28
    %s169 = sor.u32 %s167, %s168
    %p170 = scmp.eq.s32.totalorder %s169, 0
    %s172 = sadd.s32 %s171, 1
    %s173 = scalar_select %p170, %s171, %s172
    %p176 = pneg %p170
    %p177 = scmp.eq.s32.totalorder %s13, 1
    %p178 = por %p176, %p177
    %p179 = scmp.ne.s32.totalorder %s171, %s174
    %p180 = scmp.eq.s32.totalorder %s13, 0
    %p181 = por %p179, %p180
    %p182 = scmp.ne.s32.totalorder %s171, %s174
    %p183 = scmp.eq.s32.totalorder %s18, 1
    %p184 = por %p182, %p183
    %p185 = scmp.ne.s32.totalorder %s174, %s175
    %p186 = scmp.eq.s32.totalorder %s18, 0
    %p187 = por %p185, %p186
    %p188 = scmp.ne.s32.totalorder %s174, %s175
    %p189 = scmp.eq.s32.totalorder %s19, 1
    %p190 = por %p188, %p189
    %p192 = scmp.ne.s32.totalorder %s175, %s191
    %p193 = scmp.eq.s32.totalorder %s19, 0
    %p194 = por %p192, %p193
    %s195 = ssub.s32 %s20, %s32
    %s196 = ssub.s32 %s21, %s28
    %s197 = sor.u32 %s195, %s196
    %p198 = scmp.eq.s32.totalorder %s197, 0
    %s200 = sadd.s32 %s199, 1
    %s201 = scalar_select %p198, %s199, %s200
    %p204 = pneg %p198
    %p205 = scmp.eq.s32.totalorder %s13, 1
    %p206 = por %p204, %p205
    %p207 = scmp.ne.s32.totalorder %s199, %s202
    %p208 = scmp.eq.s32.totalorder %s13, 0
    %p209 = por %p207, %p208
    %p210 = scmp.ne.s32.totalorder %s199, %s202
    %p211 = scmp.eq.s32.totalorder %s18, 1
    %p212 = por %p210, %p211
    %p213 = scmp.ne.s32.totalorder %s202, %s203
    %p214 = scmp.eq.s32.totalorder %s18, 0
    %p215 = por %p213, %p214
    %p216 = scmp.ne.s32.totalorder %s202, %s203
    %p217 = scmp.eq.s32.totalorder %s19, 1
    %p218 = por %p216, %p217
    %p220 = scmp.ne.s32.totalorder %s203, %s219
    %p221 = scmp.eq.s32.totalorder %s19, 0
    %p222 = por %p220, %p221
    %s223 = ssub.s32 %s20, %s32
    %p224 = scmp.eq.s32.totalorder %s223, 0
    %s226 = sadd.s32 %s225, 1
    %s227 = scalar_select %p224, %s225, %s226
    %p230 = pneg %p224
    %p231 = scmp.eq.s32.totalorder %s13, 1
    %p232 = por %p230, %p231
    %p233 = scmp.ne.s32.totalorder %s225, %s228
    %p234 = scmp.eq.s32.totalorder %s13, 0
    %p235 = por %p233, %p234
    %p236 = scmp.ne.s32.totalorder %s225, %s228
    %p237 = scmp.eq.s32.totalorder %s18, 1
    %p238 = por %p236, %p237
    %p239 = scmp.ne.s32.totalorder %s228, %s229
    %p240 = scmp.eq.s32.totalorder %s18, 0
    %p241 = por %p239, %p240
    %p242 = scmp.ne.s32.totalorder %s228, %s229
    %p243 = scmp.eq.s32.totalorder %s19, 1
    %p244 = por %p242, %p243
    %p246 = scmp.ne.s32.totalorder %s229, %s245
    %p247 = scmp.eq.s32.totalorder %s19, 0
    %p248 = por %p246, %p247
    %p249 = scmp.le.s32.totalorder 1, %s13
    %p250 = scmp.lt.s32.totalorder %s13, 3
    %p251 = pnand %p249, %p250
    %p252 = pneg %p251
    // Predicated region
    $region9: #{tpu_custom_call.1} parent=5 // pred_check
      _
    $region10: #{tpu_custom_call.1} parent=5 // pred_check_branch
      %254 = sbr.rel (%p251) target = $region12
    $region11: #{tpu_custom_call.1} parent=5 // pred_region
      %s255 = ssub.s32 %s13, 1
    $region12: #{tpu_custom_call.1} parent=5 // pred_fallthru
      _
    %p256 = scmp.lt.s32.totalorder %s13, 2
    // Predicated region
    $region13: #{tpu_custom_call.1} parent=5 // pred_check
      %p257 = pneg %p256
    $region14: #{tpu_custom_call.1} parent=5 // pred_check_branch
      %259 = sbr.rel (%p257) target = $region16
    $region15: #{tpu_custom_call.1} parent=5 // pred_region
      // Predicated region
      $region17: #{tpu_custom_call.1} parent=15 // pred_check
        %p260 = pneg %p45
      $region18: #{tpu_custom_call.1} parent=15 // pred_check_branch
        %262 = sbr.rel (%p260) target = $region20
      $region19: #{tpu_custom_call.1} parent=15 // pred_region
        %s263 = smul.u32 8, %s20
        %p264 = scmp.lt.s32.totalorder %s263, 15
        %s265 = scalar_select %p264, %s263, 15
        %s266 = smul.addr %s265, 4
        %s267 = scalar_lea.vmem %s0, %s266
        %s268 = smul.u32 8, %s20
      $region20: #{tpu_custom_call.1} parent=15 // pred_fallthru
        _
      // Predicated region
      $region21: #{tpu_custom_call.1} parent=15 // pred_check
        %p269 = pneg %p71
      $region22: #{tpu_custom_call.1} parent=15 // pred_check_branch
        %271 = sbr.rel (%p269) target = $region24
      $region23: #{tpu_custom_call.1} parent=15 // pred_region
        %p272 = scmp.lt.s32.totalorder %s20, 1
        %s273 = scalar_select %p272, %s20, 1
        %s274 = smul.addr %s273, 8
        %s275 = scalar_lea.vmem %s1, %s274
      $region24: #{tpu_custom_call.1} parent=15 // pred_fallthru
        _
      // Predicated region
      $region25: #{tpu_custom_call.1} parent=15 // pred_check
        %p276 = pneg %p97
      $region26: #{tpu_custom_call.1} parent=15 // pred_check_branch
        %278 = sbr.rel (%p276) target = $region28
      $region27: #{tpu_custom_call.1} parent=15 // pred_region
        %s279 = smul.u32 8, %s20
        %p280 = scmp.lt.s32.totalorder %s279, 15
        %s281 = scalar_select %p280, %s279, 15
        %s282 = smul.addr %s281, 4
        %s283 = scalar_lea.vmem %s2, %s282
        %s284 = smul.u32 8, %s20
      $region28: #{tpu_custom_call.1} parent=15 // pred_fallthru
        _
      // Predicated region
      $region29: #{tpu_custom_call.1} parent=15 // pred_check
        %p285 = pneg %p125
      $region30: #{tpu_custom_call.1} parent=15 // pred_check_branch
        %287 = sbr.rel (%p285) target = $region32
      $region31: #{tpu_custom_call.1} parent=15 // pred_region
        %s288 = smul.u32 8, %s20
        %s289 = smul.u32 8, %s21
        %p290 = scmp.lt.s32.totalorder %s288, 15
        %s291 = scalar_select %p290, %s288, 15
        %p292 = scmp.lt.s32.totalorder %s289, 7
        %s293 = scalar_select %p292, %s289, 7
        %s294 = smul.addr %s291, 8
        %s295 = sadd.s32 %s293, %s294
        %s296 = smul.addr %s295, 4
        %s297 = scalar_lea.vmem %s3, %s296
        %s298 = smul.u32 8, %s20
        %s299 = smul.u32 8, %s21
      $region32: #{tpu_custom_call.1} parent=15 // pred_fallthru
        _
      // Predicated region
      $region33: #{tpu_custom_call.1} parent=15 // pred_check
        %p300 = pneg %p153
      $region34: #{tpu_custom_call.1} parent=15 // pred_check_branch
        %302 = sbr.rel (%p300) target = $region36
      $region35: #{tpu_custom_call.1} parent=15 // pred_region
        %s303 = smul.u32 8, %s20
        %s304 = smul.u32 8, %s21
        %p305 = scmp.lt.s32.totalorder %s303, 15
        %s306 = scalar_select %p305, %s303, 15
        %p307 = scmp.lt.s32.totalorder %s304, 7
        %s308 = scalar_select %p307, %s304, 7
        %s309 = smul.addr %s306, 8
        %s310 = sadd.s32 %s308, %s309
        %s311 = smul.addr %s310, 4
        %s312 = scalar_lea.vmem %s4, %s311
        %s313 = smul.u32 8, %s20
        %s314 = smul.u32 8, %s21
      $region36: #{tpu_custom_call.1} parent=15 // pred_fallthru
        _
      // Predicated region
      $region37: #{tpu_custom_call.1} parent=15 // pred_check
        %p315 = pneg %p181
      $region38: #{tpu_custom_call.1} parent=15 // pred_check_branch
        %317 = sbr.rel (%p315) target = $region40
      $region39: #{tpu_custom_call.1} parent=15 // pred_region
        %s318 = smul.u32 8, %s21
        %p319 = scmp.lt.s32.totalorder %s20, 1
        %s320 = scalar_select %p319, %s20, 1
        %p321 = scmp.lt.s32.totalorder %s318, 7
        %s322 = scalar_select %p321, %s318, 7
        %s323 = smul.addr %s320, 8
        %s324 = sadd.s32 %s322, %s323
        %s325 = smul.addr %s324, 8
        %s326 = scalar_lea.vmem %s5, %s325
        %s327 = smul.u32 8, %s21
      $region40: #{tpu_custom_call.1} parent=15 // pred_fallthru
        _
      // Predicated region
      $region41: #{tpu_custom_call.1} parent=15 // pred_check
        %p328 = pneg %p209
      $region42: #{tpu_custom_call.1} parent=15 // pred_check_branch
        %330 = sbr.rel (%p328) target = $region44
      $region43: #{tpu_custom_call.1} parent=15 // pred_region
        %s331 = smul.u32 8, %s21
        %p332 = scmp.lt.s32.totalorder %s20, 1
        %s333 = scalar_select %p332, %s20, 1
        %p334 = scmp.lt.s32.totalorder %s331, 7
        %s335 = scalar_select %p334, %s331, 7
        %s336 = smul.addr %s333, 8
        %s337 = sadd.s32 %s335, %s336
        %s338 = smul.addr %s337, 8
        %s339 = scalar_lea.vmem %s6, %s338
        %s340 = smul.u32 8, %s21
      $region44: #{tpu_custom_call.1} parent=15 // pred_fallthru
        _
    $region16: #{tpu_custom_call.1} parent=5 // pred_fallthru
      _
    %p341 = scmp.le.s32.totalorder 1, %s13
    %p342 = scmp.lt.s32.totalorder %s13, 3
    %p343 = pnand %p341, %p342
    %p344 = pneg %p343
    // Predicated region
    $region45: #{tpu_custom_call.1} parent=5 // pred_check
      _
    $region46: #{tpu_custom_call.1} parent=5 // pred_check_branch
      %346 = sbr.rel (%p343) target = $region48
    $region47: #{tpu_custom_call.1} parent=5 // pred_region
      %s347 = ssub.s32 %s13, 1
      %s348 = smul.u32 8, %s22
      %p349 = scmp.lt.s32.totalorder %s348, 15
      %s350 = scalar_select %p349, %s348, 15
      %s351 = smul.addr %s350, 4
      %s352 = scalar_lea.vmem %s0, %s351
      %p353 = pneg %p51
      %p354 = pneg %p48
      %p355 = scmp.lt.s32.totalorder %s22, 1
      %s356 = scalar_select %p355, %s22, 1
      %s357 = smul.addr %s356, 8
      %s358 = scalar_lea.vmem %s1, %s357
      %p359 = pneg %p77
      %p360 = pneg %p74
      %s361 = smul.u32 8, %s22
      %p362 = scmp.lt.s32.totalorder %s361, 15
      %s363 = scalar_select %p362, %s361, 15
      %s364 = smul.addr %s363, 4
      %s365 = scalar_lea.vmem %s2, %s364
      %p366 = pneg %p103
      %p367 = pneg %p100
      %s368 = smul.u32 8, %s22
      %s369 = smul.u32 8, %s23
      %p370 = scmp.lt.s32.totalorder %s368, 15
      %s371 = scalar_select %p370, %s368, 15
      %p372 = scmp.lt.s32.totalorder %s369, 7
      %s373 = scalar_select %p372, %s369, 7
      %s374 = smul.addr %s371, 8
      %s375 = sadd.s32 %s373, %s374
      %s376 = smul.addr %s375, 4
      %s377 = scalar_lea.vmem %s3, %s376
      %p378 = pneg %p131
      %p379 = pneg %p128
      %s380 = smul.u32 8, %s22
      %s381 = smul.u32 8, %s23
      %p382 = scmp.lt.s32.totalorder %s380, 15
      %s383 = scalar_select %p382, %s380, 15
      %p384 = scmp.lt.s32.totalorder %s381, 7
      %s385 = scalar_select %p384, %s381, 7
      %s386 = smul.addr %s383, 8
      %s387 = sadd.s32 %s385, %s386
      %s388 = smul.addr %s387, 4
      %s389 = scalar_lea.vmem %s4, %s388
      %p390 = pneg %p159
      %p391 = pneg %p156
      %s392 = smul.u32 8, %s23
      %p393 = scmp.lt.s32.totalorder %s22, 1
      %s394 = scalar_select %p393, %s22, 1
      %p395 = scmp.lt.s32.totalorder %s392, 7
      %s396 = scalar_select %p395, %s392, 7
      %s397 = smul.addr %s394, 8
      %s398 = sadd.s32 %s396, %s397
      %s399 = smul.addr %s398, 8
      %s400 = scalar_lea.vmem %s5, %s399
      %p401 = pneg %p187
      %p402 = pneg %p184
      %s403 = smul.u32 8, %s23
      %p404 = scmp.lt.s32.totalorder %s22, 1
      %s405 = scalar_select %p404, %s22, 1
      %p406 = scmp.lt.s32.totalorder %s403, 7
      %s407 = scalar_select %p406, %s403, 7
      %s408 = smul.addr %s405, 8
      %s409 = sadd.s32 %s407, %s408
      %s410 = smul.addr %s409, 8
      %s411 = scalar_lea.vmem %s6, %s410
      %p412 = pneg %p215
      %p413 = pneg %p212
      %p414 = pneg %p241
      %p415 = pneg %p238
      %p416 = scmp.lt.s32.totalorder %s22, 1
      %s417 = scalar_select %p416, %s22, 1
      %s418 = smul.addr %s417, 8
      %s419 = scalar_lea.vmem %s7, %s418
      %s420 = smul.u32 8, %s22
      %p421 = scmp.lt.s32.totalorder %s420, 15
      %s422 = scalar_select %p421, %s420, 15
      %s423 = smul.addr %s422, 4
      %s424 = scalar_lea.vmem %s0, %s423
      %s425 = smul.u32 8, %s22
      %p426 = scmp.lt.s32.totalorder %s22, 1
      %s427 = scalar_select %p426, %s22, 1
      %s428 = smul.addr %s427, 8
      %s429 = scalar_lea.vmem %s1, %s428
      %s430 = smul.u32 8, %s22
      %p431 = scmp.lt.s32.totalorder %s430, 15
      %s432 = scalar_select %p431, %s430, 15
      %s433 = smul.addr %s432, 4
      %s434 = scalar_lea.vmem %s2, %s433
      %s435 = smul.u32 8, %s22
      %s436 = smul.u32 8, %s22
      %s437 = smul.u32 8, %s23
      %p438 = scmp.lt.s32.totalorder %s436, 15
      %s439 = scalar_select %p438, %s436, 15
      %p440 = scmp.lt.s32.totalorder %s437, 7
      %s441 = scalar_select %p440, %s437, 7
      %s442 = smul.addr %s439, 8
      %s443 = sadd.s32 %s441, %s442
      %s444 = smul.addr %s443, 4
      %s445 = scalar_lea.vmem %s3, %s444
      %s446 = smul.u32 8, %s22
      %s447 = smul.u32 8, %s23
      %s448 = smul.u32 8, %s22
      %s449 = smul.u32 8, %s23
      %p450 = scmp.lt.s32.totalorder %s448, 15
      %s451 = scalar_select %p450, %s448, 15
      %p452 = scmp.lt.s32.totalorder %s449, 7
      %s453 = scalar_select %p452, %s449, 7
      %s454 = smul.addr %s451, 8
      %s455 = sadd.s32 %s453, %s454
      %s456 = smul.addr %s455, 4
      %s457 = scalar_lea.vmem %s4, %s456
      %s458 = smul.u32 8, %s22
      %s459 = smul.u32 8, %s23
      %s460 = smul.u32 8, %s23
      %p461 = scmp.lt.s32.totalorder %s22, 1
      %s462 = scalar_select %p461, %s22, 1
      %p463 = scmp.lt.s32.totalorder %s460, 7
      %s464 = scalar_select %p463, %s460, 7
      %s465 = smul.addr %s462, 8
      %s466 = sadd.s32 %s464, %s465
      %s467 = smul.addr %s466, 8
      %s468 = scalar_lea.vmem %s5, %s467
      %s469 = smul.u32 8, %s23
      %s470 = smul.u32 8, %s23
      %p471 = scmp.lt.s32.totalorder %s22, 1
      %s472 = scalar_select %p471, %s22, 1
      %p473 = scmp.lt.s32.totalorder %s470, 7
      %s474 = scalar_select %p473, %s470, 7
      %s475 = smul.addr %s472, 8
      %s476 = sadd.s32 %s474, %s475
      %s477 = smul.addr %s476, 8
      %s478 = scalar_lea.vmem %s6, %s477
      %s479 = smul.u32 8, %s23
      %p480 = scmp.lt.s32.totalorder %s22, 1
      %s481 = scalar_select %p480, %s22, 1
      %s482 = smul.addr %s481, 8
      %s483 = scalar_lea.vmem %s7, %s482
      %p484 = scmp.eq.s32.totalorder %s23, 0
      // Predicated region
      $region49: #{tpu_custom_call.1} parent=47 // pred_check
        %p485 = pneg %p484
      $region50: #{tpu_custom_call.1} parent=47 // pred_check_branch
        %487 = sbr.rel (%p485) target = $region52
      $region51: #{tpu_custom_call.1} parent=47 // pred_region
        %vm488 = vcmask 7168
        %489 = vst.msk [vmem:[#allocation2] sm:$0xff] %vm488, 0.0
        %490 = vst.msk [vmem:[#allocation3] sm:$0xff] %vm488, 0.0
        %491 = vst.msk [vmem:[#allocation4] sm:$0xff] %vm488, 0.0
      $region52: #{tpu_custom_call.1} parent=47 // pred_fallthru
        _
      %v492 = vld [vmem:[%s468] sm:$0xff]
      %v493 = vld [vmem:[%s468 + $0x8] sm:$0xff]
      %v494 = vld [vmem:[%s468 + $0x10] sm:$0xff]
      %v495 = vld [vmem:[%s468 + $0x18] sm:$0xff]
      %v496 = vld [vmem:[%s468 + $0x20] sm:$0xff]
      %v497 = vld [vmem:[%s468 + $0x28] sm:$0xff]
      %v498 = vld [vmem:[%s468 + $0x30] sm:$0xff]
      %v499 = vld [vmem:[%s468 + $0x38] sm:$0xff]
      %v500 = vld [vmem:[%s445] sm:$0x77]
      %v501 = vld [vmem:[%s445 + $0x8] sm:$0x77]
      %v502 = vld [vmem:[%s445 + $0x10] sm:$0x77]
      %v503 = vld [vmem:[%s445 + $0x18] sm:$0x77]
      %v504 = vld [vmem:[%s445 + $0x20] sm:$0x77]
      %v505 = vld [vmem:[%s445 + $0x28] sm:$0x77]
      %v506 = vld [vmem:[%s445 + $0x30] sm:$0x77]
      %v507 = vld [vmem:[%s445 + $0x38] sm:$0x77]
      %v508 = vld [vmem:[%s445 + $0x40] sm:$0x77]
      %v509 = vld [vmem:[%s445 + $0x48] sm:$0x77]
      %v510 = vld [vmem:[%s445 + $0x50] sm:$0x77]
      %v511 = vld [vmem:[%s445 + $0x58] sm:$0x77]
      %v512 = vld [vmem:[%s445 + $0x60] sm:$0x77]
      %v513 = vld [vmem:[%s445 + $0x68] sm:$0x77]
      %v514 = vld [vmem:[%s445 + $0x70] sm:$0x77]
      %v515 = vld [vmem:[%s445 + $0x78] sm:$0x77]
      %v516 = vld [vmem:[%s445 + $0x80] sm:$0x77]
      %v517 = vld [vmem:[%s445 + $0x88] sm:$0x77]
      %v518 = vld [vmem:[%s445 + $0x90] sm:$0x77]
      %v519 = vld [vmem:[%s445 + $0x98] sm:$0x77]
      %v520 = vld [vmem:[%s445 + $0xa0] sm:$0x77]
      %v521 = vld [vmem:[%s445 + $0xa8] sm:$0x77]
      %v522 = vld [vmem:[%s445 + $0xb0] sm:$0x77]
      %v523 = vld [vmem:[%s445 + $0xb8] sm:$0x77]
      %v524 = vld [vmem:[%s445 + $0xc0] sm:$0x77]
      %v525 = vld [vmem:[%s445 + $0xc8] sm:$0x77]
      %v526 = vld [vmem:[%s445 + $0xd0] sm:$0x77]
      %v527 = vld [vmem:[%s445 + $0xd8] sm:$0x77]
      %v528 = vld [vmem:[%s445 + $0xe0] sm:$0x77]
      %v529 = vld [vmem:[%s445 + $0xe8] sm:$0x77]
      %v530 = vld [vmem:[%s445 + $0xf0] sm:$0x77]
      %v531 = vld [vmem:[%s445 + $0xf8] sm:$0x77]
      %v532 = vld [vmem:[%s457] sm:$0x77]
      %v533 = vld [vmem:[%s457 + $0x8] sm:$0x77]
      %v534 = vld [vmem:[%s457 + $0x10] sm:$0x77]
      %v535 = vld [vmem:[%s457 + $0x18] sm:$0x77]
      %v536 = vld [vmem:[%s457 + $0x20] sm:$0x77]
      %v537 = vld [vmem:[%s457 + $0x28] sm:$0x77]
      %v538 = vld [vmem:[%s457 + $0x30] sm:$0x77]
      %v539 = vld [vmem:[%s457 + $0x38] sm:$0x77]
      %v540 = vld [vmem:[%s457 + $0x40] sm:$0x77]
      %v541 = vld [vmem:[%s457 + $0x48] sm:$0x77]
      %v542 = vld [vmem:[%s457 + $0x50] sm:$0x77]
      %v543 = vld [vmem:[%s457 + $0x58] sm:$0x77]
      %v544 = vld [vmem:[%s457 + $0x60] sm:$0x77]
      %v545 = vld [vmem:[%s457 + $0x68] sm:$0x77]
      %v546 = vld [vmem:[%s457 + $0x70] sm:$0x77]
      %v547 = vld [vmem:[%s457 + $0x78] sm:$0x77]
      %v548 = vld [vmem:[%s457 + $0x80] sm:$0x77]
      %v549 = vld [vmem:[%s457 + $0x88] sm:$0x77]
      %v550 = vld [vmem:[%s457 + $0x90] sm:$0x77]
      %v551 = vld [vmem:[%s457 + $0x98] sm:$0x77]
      %v552 = vld [vmem:[%s457 + $0xa0] sm:$0x77]
      %v553 = vld [vmem:[%s457 + $0xa8] sm:$0x77]
      %v554 = vld [vmem:[%s457 + $0xb0] sm:$0x77]
      %v555 = vld [vmem:[%s457 + $0xb8] sm:$0x77]
      %v556 = vld [vmem:[%s457 + $0xc0] sm:$0x77]
      %v557 = vld [vmem:[%s457 + $0xc8] sm:$0x77]
      %v558 = vld [vmem:[%s457 + $0xd0] sm:$0x77]
      %v559 = vld [vmem:[%s457 + $0xd8] sm:$0x77]
      %v560 = vld [vmem:[%s457 + $0xe0] sm:$0x77]
      %v561 = vld [vmem:[%s457 + $0xe8] sm:$0x77]
      %v562 = vld [vmem:[%s457 + $0xf0] sm:$0x77]
      %v563 = vld [vmem:[%s457 + $0xf8] sm:$0x77]
      %v564 = vsub.f32 %v532, %v500
      %v565 = vsub.f32 %v533, %v501
      %v566 = vsub.f32 %v534, %v502
      %v567 = vsub.f32 %v535, %v503
      %v568 = vsub.f32 %v536, %v504
      %v569 = vsub.f32 %v537, %v505
      %v570 = vsub.f32 %v538, %v506
      %v571 = vsub.f32 %v539, %v507
      %v572 = vsub.f32 %v540, %v508
      %v573 = vsub.f32 %v541, %v509
      %v574 = vsub.f32 %v542, %v510
      %v575 = vsub.f32 %v543, %v511
      %v576 = vsub.f32 %v544, %v512
      %v577 = vsub.f32 %v545, %v513
      %v578 = vsub.f32 %v546, %v514
      %v579 = vsub.f32 %v547, %v515
      %v580 = vsub.f32 %v548, %v516
      %v581 = vsub.f32 %v549, %v517
      %v582 = vsub.f32 %v550, %v518
      %v583 = vsub.f32 %v551, %v519
      %v584 = vsub.f32 %v552, %v520
      %v585 = vsub.f32 %v553, %v521
      %v586 = vsub.f32 %v554, %v522
      %v587 = vsub.f32 %v555, %v523
      %v588 = vsub.f32 %v556, %v524
      %v589 = vsub.f32 %v557, %v525
      %v590 = vsub.f32 %v558, %v526
      %v591 = vsub.f32 %v559, %v527
      %v592 = vsub.f32 %v560, %v528
      %v593 = vsub.f32 %v561, %v529
      %v594 = vsub.f32 %v562, %v530
      %v595 = vsub.f32 %v563, %v531
      %v596 = vand.u32 2147483647, %v564
      %v597 = vand.u32 2147483647, %v565
      %v598 = vand.u32 2147483647, %v566
      %v599 = vand.u32 2147483647, %v567
      %v600 = vand.u32 2147483647, %v568
      %v601 = vand.u32 2147483647, %v569
      %v602 = vand.u32 2147483647, %v570
      %v603 = vand.u32 2147483647, %v571
      %v604 = vand.u32 2147483647, %v572
      %v605 = vand.u32 2147483647, %v573
      %v606 = vand.u32 2147483647, %v574
      %v607 = vand.u32 2147483647, %v575
      %v608 = vand.u32 2147483647, %v576
      %v609 = vand.u32 2147483647, %v577
      %v610 = vand.u32 2147483647, %v578
      %v611 = vand.u32 2147483647, %v579
      %v612 = vand.u32 2147483647, %v580
      %v613 = vand.u32 2147483647, %v581
      %v614 = vand.u32 2147483647, %v582
      %v615 = vand.u32 2147483647, %v583
      %v616 = vand.u32 2147483647, %v584
      %v617 = vand.u32 2147483647, %v585
      %v618 = vand.u32 2147483647, %v586
      %v619 = vand.u32 2147483647, %v587
      %v620 = vand.u32 2147483647, %v588
      %v621 = vand.u32 2147483647, %v589
      %v622 = vand.u32 2147483647, %v590
      %v623 = vand.u32 2147483647, %v591
      %v624 = vand.u32 2147483647, %v592
      %v625 = vand.u32 2147483647, %v593
      %v626 = vand.u32 2147483647, %v594
      %v627 = vand.u32 2147483647, %v595
      %v660 = vcombine.high %v596, %v596
      %v661 = vcombine.high %v597, %v597
      %v662 = vcombine.high %v598, %v598
      %v663 = vcombine.high %v599, %v599
      %v664 = vcombine.high %v600, %v600
      %v665 = vcombine.high %v601, %v601
      %v666 = vcombine.high %v602, %v602
      %v667 = vcombine.high %v603, %v603
      %v668 = vcombine.high %v604, %v604
      %v669 = vcombine.high %v605, %v605
      %v670 = vcombine.high %v606, %v606
      %v671 = vcombine.high %v607, %v607
      %v672 = vcombine.high %v608, %v608
      %v673 = vcombine.high %v609, %v609
      %v674 = vcombine.high %v610, %v610
      %v675 = vcombine.high %v611, %v611
      %v676 = vcombine.high %v612, %v612
      %v677 = vcombine.high %v613, %v613
      %v678 = vcombine.high %v614, %v614
      %v679 = vcombine.high %v615, %v615
      %v680 = vcombine.high %v616, %v616
      %v681 = vcombine.high %v617, %v617
      %v682 = vcombine.high %v618, %v618
      %v683 = vcombine.high %v619, %v619
      %v684 = vcombine.high %v620, %v620
      %v685 = vcombine.high %v621, %v621
      %v686 = vcombine.high %v622, %v622
      %v687 = vcombine.high %v623, %v623
      %v688 = vcombine.high %v624, %v624
      %v689 = vcombine.high %v625, %v625
      %v690 = vcombine.high %v626, %v626
      %v691 = vcombine.high %v627, %v627
      %vm724 = vcmask 1042432
      %v725 = vsel %vm724, %v596, 0.0
      %v726 = vrot.slane %v725, 4
      %v727 = vadd.f32 %v725, %v726
      %v728 = vrot.slane %v727, 2
      %v729 = vadd.f32 %v727, %v728
      %v730 = vrot.slane %v729, 1
      %v731 = vadd.f32 %v729, %v730
      %v732 = vsel %vm724, %v660, 0.0
      %v733 = vrot.slane %v732, 4
      %v734 = vadd.f32 %v732, %v733
      %v735 = vrot.slane %v734, 2
      %v736 = vadd.f32 %v734, %v735
      %v737 = vrot.slane %v736, 1
      %v738 = vadd.f32 %v736, %v737
      %v739 = vsel %vm724, %v597, 0.0
      %v740 = vrot.slane %v739, 4
      %v741 = vadd.f32 %v739, %v740
      %v742 = vrot.slane %v741, 2
      %v743 = vadd.f32 %v741, %v742
      %v744 = vrot.slane %v743, 1
      %v745 = vadd.f32 %v743, %v744
      %v746 = vsel %vm724, %v661, 0.0
      %v747 = vrot.slane %v746, 4
      %v748 = vadd.f32 %v746, %v747
      %v749 = vrot.slane %v748, 2
      %v750 = vadd.f32 %v748, %v749
      %v751 = vrot.slane %v750, 1
      %v752 = vadd.f32 %v750, %v751
      %v753 = vsel %vm724, %v598, 0.0
      %v754 = vrot.slane %v753, 4
      %v755 = vadd.f32 %v753, %v754
      %v756 = vrot.slane %v755, 2
      %v757 = vadd.f32 %v755, %v756
      %v758 = vrot.slane %v757, 1
      %v759 = vadd.f32 %v757, %v758
      %v760 = vsel %vm724, %v662, 0.0
      %v761 = vrot.slane %v760, 4
      %v762 = vadd.f32 %v760, %v761
      %v763 = vrot.slane %v762, 2
      %v764 = vadd.f32 %v762, %v763
      %v765 = vrot.slane %v764, 1
      %v766 = vadd.f32 %v764, %v765
      %v767 = vsel %vm724, %v599, 0.0
      %v768 = vrot.slane %v767, 4
      %v769 = vadd.f32 %v767, %v768
      %v770 = vrot.slane %v769, 2
      %v771 = vadd.f32 %v769, %v770
      %v772 = vrot.slane %v771, 1
      %v773 = vadd.f32 %v771, %v772
      %v774 = vsel %vm724, %v663, 0.0
      %v775 = vrot.slane %v774, 4
      %v776 = vadd.f32 %v774, %v775
      %v777 = vrot.slane %v776, 2
      %v778 = vadd.f32 %v776, %v777
      %v779 = vrot.slane %v778, 1
      %v780 = vadd.f32 %v778, %v779
      %v781 = vsel %vm724, %v600, 0.0
      %v782 = vrot.slane %v781, 4
      %v783 = vadd.f32 %v781, %v782
      %v784 = vrot.slane %v783, 2
      %v785 = vadd.f32 %v783, %v784
      %v786 = vrot.slane %v785, 1
      %v787 = vadd.f32 %v785, %v786
      %v788 = vsel %vm724, %v664, 0.0
      %v789 = vrot.slane %v788, 4
      %v790 = vadd.f32 %v788, %v789
      %v791 = vrot.slane %v790, 2
      %v792 = vadd.f32 %v790, %v791
      %v793 = vrot.slane %v792, 1
      %v794 = vadd.f32 %v792, %v793
      %v795 = vsel %vm724, %v601, 0.0
      %v796 = vrot.slane %v795, 4
      %v797 = vadd.f32 %v795, %v796
      %v798 = vrot.slane %v797, 2
      %v799 = vadd.f32 %v797, %v798
      %v800 = vrot.slane %v799, 1
      %v801 = vadd.f32 %v799, %v800
      %v802 = vsel %vm724, %v665, 0.0
      %v803 = vrot.slane %v802, 4
      %v804 = vadd.f32 %v802, %v803
      %v805 = vrot.slane %v804, 2
      %v806 = vadd.f32 %v804, %v805
      %v807 = vrot.slane %v806, 1
      %v808 = vadd.f32 %v806, %v807
      %v809 = vsel %vm724, %v602, 0.0
      %v810 = vrot.slane %v809, 4
      %v811 = vadd.f32 %v809, %v810
      %v812 = vrot.slane %v811, 2
      %v813 = vadd.f32 %v811, %v812
      %v814 = vrot.slane %v813, 1
      %v815 = vadd.f32 %v813, %v814
      %v816 = vsel %vm724, %v666, 0.0
      %v817 = vrot.slane %v816, 4
      %v818 = vadd.f32 %v816, %v817
      %v819 = vrot.slane %v818, 2
      %v820 = vadd.f32 %v818, %v819
      %v821 = vrot.slane %v820, 1
      %v822 = vadd.f32 %v820, %v821
      %v823 = vsel %vm724, %v603, 0.0
      %v824 = vrot.slane %v823, 4
      %v825 = vadd.f32 %v823, %v824
      %v826 = vrot.slane %v825, 2
      %v827 = vadd.f32 %v825, %v826
      %v828 = vrot.slane %v827, 1
      %v829 = vadd.f32 %v827, %v828
      %v830 = vsel %vm724, %v667, 0.0
      %v831 = vrot.slane %v830, 4
      %v832 = vadd.f32 %v830, %v831
      %v833 = vrot.slane %v832, 2
      %v834 = vadd.f32 %v832, %v833
      %v835 = vrot.slane %v834, 1
      %v836 = vadd.f32 %v834, %v835
      %v837 = vsel %vm724, %v604, 0.0
      %v838 = vrot.slane %v837, 4
      %v839 = vadd.f32 %v837, %v838
      %v840 = vrot.slane %v839, 2
      %v841 = vadd.f32 %v839, %v840
      %v842 = vrot.slane %v841, 1
      %v843 = vadd.f32 %v841, %v842
      %v844 = vsel %vm724, %v668, 0.0
      %v845 = vrot.slane %v844, 4
      %v846 = vadd.f32 %v844, %v845
      %v847 = vrot.slane %v846, 2
      %v848 = vadd.f32 %v846, %v847
      %v849 = vrot.slane %v848, 1
      %v850 = vadd.f32 %v848, %v849
      %v851 = vsel %vm724, %v605, 0.0
      %v852 = vrot.slane %v851, 4
      %v853 = vadd.f32 %v851, %v852
      %v854 = vrot.slane %v853, 2
      %v855 = vadd.f32 %v853, %v854
      %v856 = vrot.slane %v855, 1
      %v857 = vadd.f32 %v855, %v856
      %v858 = vsel %vm724, %v669, 0.0
      %v859 = vrot.slane %v858, 4
      %v860 = vadd.f32 %v858, %v859
      %v861 = vrot.slane %v860, 2
      %v862 = vadd.f32 %v860, %v861
      %v863 = vrot.slane %v862, 1
      %v864 = vadd.f32 %v862, %v863
      %v865 = vsel %vm724, %v606, 0.0
      %v866 = vrot.slane %v865, 4
      %v867 = vadd.f32 %v865, %v866
      %v868 = vrot.slane %v867, 2
      %v869 = vadd.f32 %v867, %v868
      %v870 = vrot.slane %v869, 1
      %v871 = vadd.f32 %v869, %v870
      %v872 = vsel %vm724, %v670, 0.0
      %v873 = vrot.slane %v872, 4
      %v874 = vadd.f32 %v872, %v873
      %v875 = vrot.slane %v874, 2
      %v876 = vadd.f32 %v874, %v875
      %v877 = vrot.slane %v876, 1
      %v878 = vadd.f32 %v876, %v877
      %v879 = vsel %vm724, %v607, 0.0
      %v880 = vrot.slane %v879, 4
      %v881 = vadd.f32 %v879, %v880
      %v882 = vrot.slane %v881, 2
      %v883 = vadd.f32 %v881, %v882
      %v884 = vrot.slane %v883, 1
      %v885 = vadd.f32 %v883, %v884
      %v886 = vsel %vm724, %v671, 0.0
      %v887 = vrot.slane %v886, 4
      %v888 = vadd.f32 %v886, %v887
      %v889 = vrot.slane %v888, 2
      %v890 = vadd.f32 %v888, %v889
      %v891 = vrot.slane %v890, 1
      %v892 = vadd.f32 %v890, %v891
      %v893 = vsel %vm724, %v608, 0.0
      %v894 = vrot.slane %v893, 4
      %v895 = vadd.f32 %v893, %v894
      %v896 = vrot.slane %v895, 2
      %v897 = vadd.f32 %v895, %v896
      %v898 = vrot.slane %v897, 1
      %v899 = vadd.f32 %v897, %v898
      %v900 = vsel %vm724, %v672, 0.0
      %v901 = vrot.slane %v900, 4
      %v902 = vadd.f32 %v900, %v901
      %v903 = vrot.slane %v902, 2
      %v904 = vadd.f32 %v902, %v903
      %v905 = vrot.slane %v904, 1
      %v906 = vadd.f32 %v904, %v905
      %v907 = vsel %vm724, %v609, 0.0
      %v908 = vrot.slane %v907, 4
      %v909 = vadd.f32 %v907, %v908
      %v910 = vrot.slane %v909, 2
      %v911 = vadd.f32 %v909, %v910
      %v912 = vrot.slane %v911, 1
      %v913 = vadd.f32 %v911, %v912
      %v914 = vsel %vm724, %v673, 0.0
      %v915 = vrot.slane %v914, 4
      %v916 = vadd.f32 %v914, %v915
      %v917 = vrot.slane %v916, 2
      %v918 = vadd.f32 %v916, %v917
      %v919 = vrot.slane %v918, 1
      %v920 = vadd.f32 %v918, %v919
      %v921 = vsel %vm724, %v610, 0.0
      %v922 = vrot.slane %v921, 4
      %v923 = vadd.f32 %v921, %v922
      %v924 = vrot.slane %v923, 2
      %v925 = vadd.f32 %v923, %v924
      %v926 = vrot.slane %v925, 1
      %v927 = vadd.f32 %v925, %v926
      %v928 = vsel %vm724, %v674, 0.0
      %v929 = vrot.slane %v928, 4
      %v930 = vadd.f32 %v928, %v929
      %v931 = vrot.slane %v930, 2
      %v932 = vadd.f32 %v930, %v931
      %v933 = vrot.slane %v932, 1
      %v934 = vadd.f32 %v932, %v933
      %v935 = vsel %vm724, %v611, 0.0
      %v936 = vrot.slane %v935, 4
      %v937 = vadd.f32 %v935, %v936
      %v938 = vrot.slane %v937, 2
      %v939 = vadd.f32 %v937, %v938
      %v940 = vrot.slane %v939, 1
      %v941 = vadd.f32 %v939, %v940
      %v942 = vsel %vm724, %v675, 0.0
      %v943 = vrot.slane %v942, 4
      %v944 = vadd.f32 %v942, %v943
      %v945 = vrot.slane %v944, 2
      %v946 = vadd.f32 %v944, %v945
      %v947 = vrot.slane %v946, 1
      %v948 = vadd.f32 %v946, %v947
      %v949 = vsel %vm724, %v612, 0.0
      %v950 = vrot.slane %v949, 4
      %v951 = vadd.f32 %v949, %v950
      %v952 = vrot.slane %v951, 2
      %v953 = vadd.f32 %v951, %v952
      %v954 = vrot.slane %v953, 1
      %v955 = vadd.f32 %v953, %v954
      %v956 = vsel %vm724, %v676, 0.0
      %v957 = vrot.slane %v956, 4
      %v958 = vadd.f32 %v956, %v957
      %v959 = vrot.slane %v958, 2
      %v960 = vadd.f32 %v958, %v959
      %v961 = vrot.slane %v960, 1
      %v962 = vadd.f32 %v960, %v961
      %v963 = vsel %vm724, %v613, 0.0
      %v964 = vrot.slane %v963, 4
      %v965 = vadd.f32 %v963, %v964
      %v966 = vrot.slane %v965, 2
      %v967 = vadd.f32 %v965, %v966
      %v968 = vrot.slane %v967, 1
      %v969 = vadd.f32 %v967, %v968
      %v970 = vsel %vm724, %v677, 0.0
      %v971 = vrot.slane %v970, 4
      %v972 = vadd.f32 %v970, %v971
      %v973 = vrot.slane %v972, 2
      %v974 = vadd.f32 %v972, %v973
      %v975 = vrot.slane %v974, 1
      %v976 = vadd.f32 %v974, %v975
      %v977 = vsel %vm724, %v614, 0.0
      %v978 = vrot.slane %v977, 4
      %v979 = vadd.f32 %v977, %v978
      %v980 = vrot.slane %v979, 2
      %v981 = vadd.f32 %v979, %v980
      %v982 = vrot.slane %v981, 1
      %v983 = vadd.f32 %v981, %v982
      %v984 = vsel %vm724, %v678, 0.0
      %v985 = vrot.slane %v984, 4
      %v986 = vadd.f32 %v984, %v985
      %v987 = vrot.slane %v986, 2
      %v988 = vadd.f32 %v986, %v987
      %v989 = vrot.slane %v988, 1
      %v990 = vadd.f32 %v988, %v989
      %v991 = vsel %vm724, %v615, 0.0
      %v992 = vrot.slane %v991, 4
      %v993 = vadd.f32 %v991, %v992
      %v994 = vrot.slane %v993, 2
      %v995 = vadd.f32 %v993, %v994
      %v996 = vrot.slane %v995, 1
      %v997 = vadd.f32 %v995, %v996
      %v998 = vsel %vm724, %v679, 0.0
      %v999 = vrot.slane %v998, 4
      %v1000 = vadd.f32 %v998, %v999
      %v1001 = vrot.slane %v1000, 2
      %v1002 = vadd.f32 %v1000, %v1001
      %v1003 = vrot.slane %v1002, 1
      %v1004 = vadd.f32 %v1002, %v1003
      %v1005 = vsel %vm724, %v616, 0.0
      %v1006 = vrot.slane %v1005, 4
      %v1007 = vadd.f32 %v1005, %v1006
      %v1008 = vrot.slane %v1007, 2
      %v1009 = vadd.f32 %v1007, %v1008
      %v1010 = vrot.slane %v1009, 1
      %v1011 = vadd.f32 %v1009, %v1010
      %v1012 = vsel %vm724, %v680, 0.0
      %v1013 = vrot.slane %v1012, 4
      %v1014 = vadd.f32 %v1012, %v1013
      %v1015 = vrot.slane %v1014, 2
      %v1016 = vadd.f32 %v1014, %v1015
      %v1017 = vrot.slane %v1016, 1
      %v1018 = vadd.f32 %v1016, %v1017
      %v1019 = vsel %vm724, %v617, 0.0
      %v1020 = vrot.slane %v1019, 4
      %v1021 = vadd.f32 %v1019, %v1020
      %v1022 = vrot.slane %v1021, 2
      %v1023 = vadd.f32 %v1021, %v1022
      %v1024 = vrot.slane %v1023, 1
      %v1025 = vadd.f32 %v1023, %v1024
      %v1026 = vsel %vm724, %v681, 0.0
      %v1027 = vrot.slane %v1026, 4
      %v1028 = vadd.f32 %v1026, %v1027
      %v1029 = vrot.slane %v1028, 2
      %v1030 = vadd.f32 %v1028, %v1029
      %v1031 = vrot.slane %v1030, 1
      %v1032 = vadd.f32 %v1030, %v1031
      %v1033 = vsel %vm724, %v618, 0.0
      %v1034 = vrot.slane %v1033, 4
      %v1035 = vadd.f32 %v1033, %v1034
      %v1036 = vrot.slane %v1035, 2
      %v1037 = vadd.f32 %v1035, %v1036
      %v1038 = vrot.slane %v1037, 1
      %v1039 = vadd.f32 %v1037, %v1038
      %v1040 = vsel %vm724, %v682, 0.0
      %v1041 = vrot.slane %v1040, 4
      %v1042 = vadd.f32 %v1040, %v1041
      %v1043 = vrot.slane %v1042, 2
      %v1044 = vadd.f32 %v1042, %v1043
      %v1045 = vrot.slane %v1044, 1
      %v1046 = vadd.f32 %v1044, %v1045
      %v1047 = vsel %vm724, %v619, 0.0
      %v1048 = vrot.slane %v1047, 4
      %v1049 = vadd.f32 %v1047, %v1048
      %v1050 = vrot.slane %v1049, 2
      %v1051 = vadd.f32 %v1049, %v1050
      %v1052 = vrot.slane %v1051, 1
      %v1053 = vadd.f32 %v1051, %v1052
      %v1054 = vsel %vm724, %v683, 0.0
      %v1055 = vrot.slane %v1054, 4
      %v1056 = vadd.f32 %v1054, %v1055
      %v1057 = vrot.slane %v1056, 2
      %v1058 = vadd.f32 %v1056, %v1057
      %v1059 = vrot.slane %v1058, 1
      %v1060 = vadd.f32 %v1058, %v1059
      %v1061 = vsel %vm724, %v620, 0.0
      %v1062 = vrot.slane %v1061, 4
      %v1063 = vadd.f32 %v1061, %v1062
      %v1064 = vrot.slane %v1063, 2
      %v1065 = vadd.f32 %v1063, %v1064
      %v1066 = vrot.slane %v1065, 1
      %v1067 = vadd.f32 %v1065, %v1066
      %v1068 = vsel %vm724, %v684, 0.0
      %v1069 = vrot.slane %v1068, 4
      %v1070 = vadd.f32 %v1068, %v1069
      %v1071 = vrot.slane %v1070, 2
      %v1072 = vadd.f32 %v1070, %v1071
      %v1073 = vrot.slane %v1072, 1
      %v1074 = vadd.f32 %v1072, %v1073
      %v1075 = vsel %vm724, %v621, 0.0
      %v1076 = vrot.slane %v1075, 4
      %v1077 = vadd.f32 %v1075, %v1076
      %v1078 = vrot.slane %v1077, 2
      %v1079 = vadd.f32 %v1077, %v1078
      %v1080 = vrot.slane %v1079, 1
      %v1081 = vadd.f32 %v1079, %v1080
      %v1082 = vsel %vm724, %v685, 0.0
      %v1083 = vrot.slane %v1082, 4
      %v1084 = vadd.f32 %v1082, %v1083
      %v1085 = vrot.slane %v1084, 2
      %v1086 = vadd.f32 %v1084, %v1085
      %v1087 = vrot.slane %v1086, 1
      %v1088 = vadd.f32 %v1086, %v1087
      %v1089 = vsel %vm724, %v622, 0.0
      %v1090 = vrot.slane %v1089, 4
      %v1091 = vadd.f32 %v1089, %v1090
      %v1092 = vrot.slane %v1091, 2
      %v1093 = vadd.f32 %v1091, %v1092
      %v1094 = vrot.slane %v1093, 1
      %v1095 = vadd.f32 %v1093, %v1094
      %v1096 = vsel %vm724, %v686, 0.0
      %v1097 = vrot.slane %v1096, 4
      %v1098 = vadd.f32 %v1096, %v1097
      %v1099 = vrot.slane %v1098, 2
      %v1100 = vadd.f32 %v1098, %v1099
      %v1101 = vrot.slane %v1100, 1
      %v1102 = vadd.f32 %v1100, %v1101
      %v1103 = vsel %vm724, %v623, 0.0
      %v1104 = vrot.slane %v1103, 4
      %v1105 = vadd.f32 %v1103, %v1104
      %v1106 = vrot.slane %v1105, 2
      %v1107 = vadd.f32 %v1105, %v1106
      %v1108 = vrot.slane %v1107, 1
      %v1109 = vadd.f32 %v1107, %v1108
      %v1110 = vsel %vm724, %v687, 0.0
      %v1111 = vrot.slane %v1110, 4
      %v1112 = vadd.f32 %v1110, %v1111
      %v1113 = vrot.slane %v1112, 2
      %v1114 = vadd.f32 %v1112, %v1113
      %v1115 = vrot.slane %v1114, 1
      %v1116 = vadd.f32 %v1114, %v1115
      %v1117 = vsel %vm724, %v624, 0.0
      %v1118 = vrot.slane %v1117, 4
      %v1119 = vadd.f32 %v1117, %v1118
      %v1120 = vrot.slane %v1119, 2
      %v1121 = vadd.f32 %v1119, %v1120
      %v1122 = vrot.slane %v1121, 1
      %v1123 = vadd.f32 %v1121, %v1122
      %v1124 = vsel %vm724, %v688, 0.0
      %v1125 = vrot.slane %v1124, 4
      %v1126 = vadd.f32 %v1124, %v1125
      %v1127 = vrot.slane %v1126, 2
      %v1128 = vadd.f32 %v1126, %v1127
      %v1129 = vrot.slane %v1128, 1
      %v1130 = vadd.f32 %v1128, %v1129
      %v1131 = vsel %vm724, %v625, 0.0
      %v1132 = vrot.slane %v1131, 4
      %v1133 = vadd.f32 %v1131, %v1132
      %v1134 = vrot.slane %v1133, 2
      %v1135 = vadd.f32 %v1133, %v1134
      %v1136 = vrot.slane %v1135, 1
      %v1137 = vadd.f32 %v1135, %v1136
      %v1138 = vsel %vm724, %v689, 0.0
      %v1139 = vrot.slane %v1138, 4
      %v1140 = vadd.f32 %v1138, %v1139
      %v1141 = vrot.slane %v1140, 2
      %v1142 = vadd.f32 %v1140, %v1141
      %v1143 = vrot.slane %v1142, 1
      %v1144 = vadd.f32 %v1142, %v1143
      %v1145 = vsel %vm724, %v626, 0.0
      %v1146 = vrot.slane %v1145, 4
      %v1147 = vadd.f32 %v1145, %v1146
      %v1148 = vrot.slane %v1147, 2
      %v1149 = vadd.f32 %v1147, %v1148
      %v1150 = vrot.slane %v1149, 1
      %v1151 = vadd.f32 %v1149, %v1150
      %v1152 = vsel %vm724, %v690, 0.0
      %v1153 = vrot.slane %v1152, 4
      %v1154 = vadd.f32 %v1152, %v1153
      %v1155 = vrot.slane %v1154, 2
      %v1156 = vadd.f32 %v1154, %v1155
      %v1157 = vrot.slane %v1156, 1
      %v1158 = vadd.f32 %v1156, %v1157
      %v1159 = vsel %vm724, %v627, 0.0
      %v1160 = vrot.slane %v1159, 4
      %v1161 = vadd.f32 %v1159, %v1160
      %v1162 = vrot.slane %v1161, 2
      %v1163 = vadd.f32 %v1161, %v1162
      %v1164 = vrot.slane %v1163, 1
      %v1165 = vadd.f32 %v1163, %v1164
      %v1166 = vsel %vm724, %v691, 0.0
      %v1167 = vrot.slane %v1166, 4
      %v1168 = vadd.f32 %v1166, %v1167
      %v1169 = vrot.slane %v1168, 2
      %v1170 = vadd.f32 %v1168, %v1169
      %v1171 = vrot.slane %v1170, 1
      %v1172 = vadd.f32 %v1170, %v1171
      %v1173 = vld [vmem:[#allocation2] sm:$0xff]
      %v1182 = vrot.slane %v492, 1
      %v1183 = vrot.slane %v493, 1
      %v1184 = vrot.slane %v494, 1
      %v1185 = vrot.slane %v495, 1
      %v1186 = vrot.slane %v496, 1
      %v1187 = vrot.slane %v497, 1
      %v1188 = vrot.slane %v498, 1
      %v1189 = vrot.slane %v499, 1
      %v1190 = vrot.slane %v492, 2
      %v1191 = vrot.slane %v493, 2
      %v1192 = vrot.slane %v494, 2
      %v1193 = vrot.slane %v495, 2
      %v1194 = vrot.slane %v496, 2
      %v1195 = vrot.slane %v497, 2
      %v1196 = vrot.slane %v498, 2
      %v1197 = vrot.slane %v499, 2
      %v1198 = vrot.slane %v492, 3
      %v1199 = vrot.slane %v493, 3
      %v1200 = vrot.slane %v494, 3
      %v1201 = vrot.slane %v495, 3
      %v1202 = vrot.slane %v496, 3
      %v1203 = vrot.slane %v497, 3
      %v1204 = vrot.slane %v498, 3
      %v1205 = vrot.slane %v499, 3
      %v1206 = vrot.slane %v492, 4
      %v1207 = vrot.slane %v493, 4
      %v1208 = vrot.slane %v494, 4
      %v1209 = vrot.slane %v495, 4
      %v1210 = vrot.slane %v496, 4
      %v1211 = vrot.slane %v497, 4
      %v1212 = vrot.slane %v498, 4
      %v1213 = vrot.slane %v499, 4
      %v1214 = vrot.slane %v492, 5
      %v1215 = vrot.slane %v493, 5
      %v1216 = vrot.slane %v494, 5
      %v1217 = vrot.slane %v495, 5
      %v1218 = vrot.slane %v496, 5
      %v1219 = vrot.slane %v497, 5
      %v1220 = vrot.slane %v498, 5
      %v1221 = vrot.slane %v499, 5
      %v1222 = vrot.slane %v492, 6
      %v1223 = vrot.slane %v493, 6
      %v1224 = vrot.slane %v494, 6
      %v1225 = vrot.slane %v495, 6
      %v1226 = vrot.slane %v496, 6
      %v1227 = vrot.slane %v497, 6
      %v1228 = vrot.slane %v498, 6
      %v1229 = vrot.slane %v499, 6
      %v1230 = vrot.slane %v492, 7
      %v1231 = vrot.slane %v493, 7
      %v1232 = vrot.slane %v494, 7
      %v1233 = vrot.slane %v495, 7
      %v1234 = vrot.slane %v496, 7
      %v1235 = vrot.slane %v497, 7
      %v1236 = vrot.slane %v498, 7
      %v1237 = vrot.slane %v499, 7
      %v1302 = vmul.f32 %v731, %v492
      %v1303 = vmul.f32 %v738, %v493
      %v1304 = vmul.f32 %v745, %v494
      %v1305 = vmul.f32 %v752, %v495
      %v1306 = vmul.f32 %v759, %v496
      %v1307 = vmul.f32 %v766, %v497
      %v1308 = vmul.f32 %v773, %v498
      %v1309 = vmul.f32 %v780, %v499
      %v1310 = vmul.f32 %v787, %v1182
      %v1311 = vmul.f32 %v794, %v1183
      %v1312 = vmul.f32 %v801, %v1184
      %v1313 = vmul.f32 %v808, %v1185
      %v1314 = vmul.f32 %v815, %v1186
      %v1315 = vmul.f32 %v822, %v1187
      %v1316 = vmul.f32 %v829, %v1188
      %v1317 = vmul.f32 %v836, %v1189
      %v1318 = vmul.f32 %v843, %v1190
      %v1319 = vmul.f32 %v850, %v1191
      %v1320 = vmul.f32 %v857, %v1192
      %v1321 = vmul.f32 %v864, %v1193
      %v1322 = vmul.f32 %v871, %v1194
      %v1323 = vmul.f32 %v878, %v1195
      %v1324 = vmul.f32 %v885, %v1196
      %v1325 = vmul.f32 %v892, %v1197
      %v1326 = vmul.f32 %v899, %v1198
      %v1327 = vmul.f32 %v906, %v1199
      %v1328 = vmul.f32 %v913, %v1200
      %v1329 = vmul.f32 %v920, %v1201
      %v1330 = vmul.f32 %v927, %v1202
      %v1331 = vmul.f32 %v934, %v1203
      %v1332 = vmul.f32 %v941, %v1204
      %v1333 = vmul.f32 %v948, %v1205
      %v1334 = vmul.f32 %v955, %v1206
      %v1335 = vmul.f32 %v962, %v1207
      %v1336 = vmul.f32 %v969, %v1208
      %v1337 = vmul.f32 %v976, %v1209
      %v1338 = vmul.f32 %v983, %v1210
      %v1339 = vmul.f32 %v990, %v1211
      %v1340 = vmul.f32 %v997, %v1212
      %v1341 = vmul.f32 %v1004, %v1213
      %v1342 = vmul.f32 %v1011, %v1214
      %v1343 = vmul.f32 %v1018, %v1215
      %v1344 = vmul.f32 %v1025, %v1216
      %v1345 = vmul.f32 %v1032, %v1217
      %v1346 = vmul.f32 %v1039, %v1218
      %v1347 = vmul.f32 %v1046, %v1219
      %v1348 = vmul.f32 %v1053, %v1220
      %v1349 = vmul.f32 %v1060, %v1221
      %v1350 = vmul.f32 %v1067, %v1222
      %v1351 = vmul.f32 %v1074, %v1223
      %v1352 = vmul.f32 %v1081, %v1224
      %v1353 = vmul.f32 %v1088, %v1225
      %v1354 = vmul.f32 %v1095, %v1226
      %v1355 = vmul.f32 %v1102, %v1227
      %v1356 = vmul.f32 %v1109, %v1228
      %v1357 = vmul.f32 %v1116, %v1229
      %v1358 = vmul.f32 %v1123, %v1230
      %v1359 = vmul.f32 %v1130, %v1231
      %v1360 = vmul.f32 %v1137, %v1232
      %v1361 = vmul.f32 %v1144, %v1233
      %v1362 = vmul.f32 %v1151, %v1234
      %v1363 = vmul.f32 %v1158, %v1235
      %v1364 = vmul.f32 %v1165, %v1236
      %v1365 = vmul.f32 %v1172, %v1237
      %v1430 = vrot.slane %v1310, 7
      %vm1431 = vcmask 1041409
      %v1432 = vsel %vm1431, %v1430, %v1302
      %v1433 = vrot.slane %v1318, 6
      %vm1434 = vcmask 1042434
      %v1435 = vsel %vm1434, %v1433, %v1432
      %v1436 = vrot.slane %v1326, 5
      %vm1437 = vcmask 1043459
      %v1438 = vsel %vm1437, %v1436, %v1435
      %v1439 = vrot.slane %v1334, 4
      %vm1440 = vcmask 1044484
      %v1441 = vsel %vm1440, %v1439, %v1438
      %v1442 = vrot.slane %v1342, 3
      %vm1443 = vcmask 1045509
      %v1444 = vsel %vm1443, %v1442, %v1441
      %v1445 = vrot.slane %v1350, 2
      %vm1446 = vcmask 1046534
      %v1447 = vsel %vm1446, %v1445, %v1444
      %v1448 = vrot.slane %v1358, 1
      %vm1449 = vcmask 1047559
      %v1450 = vsel %vm1449, %v1448, %v1447
      %v1451 = vrot.slane %v1311, 7
      %v1452 = vsel %vm1431, %v1451, %v1303
      %v1453 = vrot.slane %v1319, 6
      %v1454 = vsel %vm1434, %v1453, %v1452
      %v1455 = vrot.slane %v1327, 5
      %v1456 = vsel %vm1437, %v1455, %v1454
      %v1457 = vrot.slane %v1335, 4
      %v1458 = vsel %vm1440, %v1457, %v1456
      %v1459 = vrot.slane %v1343, 3
      %v1460 = vsel %vm1443, %v1459, %v1458
      %v1461 = vrot.slane %v1351, 2
      %v1462 = vsel %vm1446, %v1461, %v1460
      %v1463 = vrot.slane %v1359, 1
      %v1464 = vsel %vm1449, %v1463, %v1462
      %v1465 = vrot.slane %v1312, 7
      %v1466 = vsel %vm1431, %v1465, %v1304
      %v1467 = vrot.slane %v1320, 6
      %v1468 = vsel %vm1434, %v1467, %v1466
      %v1469 = vrot.slane %v1328, 5
      %v1470 = vsel %vm1437, %v1469, %v1468
      %v1471 = vrot.slane %v1336, 4
      %v1472 = vsel %vm1440, %v1471, %v1470
      %v1473 = vrot.slane %v1344, 3
      %v1474 = vsel %vm1443, %v1473, %v1472
      %v1475 = vrot.slane %v1352, 2
      %v1476 = vsel %vm1446, %v1475, %v1474
      %v1477 = vrot.slane %v1360, 1
      %v1478 = vsel %vm1449, %v1477, %v1476
      %v1479 = vrot.slane %v1313, 7
      %v1480 = vsel %vm1431, %v1479, %v1305
      %v1481 = vrot.slane %v1321, 6
      %v1482 = vsel %vm1434, %v1481, %v1480
      %v1483 = vrot.slane %v1329, 5
      %v1484 = vsel %vm1437, %v1483, %v1482
      %v1485 = vrot.slane %v1337, 4
      %v1486 = vsel %vm1440, %v1485, %v1484
      %v1487 = vrot.slane %v1345, 3
      %v1488 = vsel %vm1443, %v1487, %v1486
      %v1489 = vrot.slane %v1353, 2
      %v1490 = vsel %vm1446, %v1489, %v1488
      %v1491 = vrot.slane %v1361, 1
      %v1492 = vsel %vm1449, %v1491, %v1490
      %v1493 = vrot.slane %v1314, 7
      %v1494 = vsel %vm1431, %v1493, %v1306
      %v1495 = vrot.slane %v1322, 6
      %v1496 = vsel %vm1434, %v1495, %v1494
      %v1497 = vrot.slane %v1330, 5
      %v1498 = vsel %vm1437, %v1497, %v1496
      %v1499 = vrot.slane %v1338, 4
      %v1500 = vsel %vm1440, %v1499, %v1498
      %v1501 = vrot.slane %v1346, 3
      %v1502 = vsel %vm1443, %v1501, %v1500
      %v1503 = vrot.slane %v1354, 2
      %v1504 = vsel %vm1446, %v1503, %v1502
      %v1505 = vrot.slane %v1362, 1
      %v1506 = vsel %vm1449, %v1505, %v1504
      %v1507 = vrot.slane %v1315, 7
      %v1508 = vsel %vm1431, %v1507, %v1307
      %v1509 = vrot.slane %v1323, 6
      %v1510 = vsel %vm1434, %v1509, %v1508
      %v1511 = vrot.slane %v1331, 5
      %v1512 = vsel %vm1437, %v1511, %v1510
      %v1513 = vrot.slane %v1339, 4
      %v1514 = vsel %vm1440, %v1513, %v1512
      %v1515 = vrot.slane %v1347, 3
      %v1516 = vsel %vm1443, %v1515, %v1514
      %v1517 = vrot.slane %v1355, 2
      %v1518 = vsel %vm1446, %v1517, %v1516
      %v1519 = vrot.slane %v1363, 1
      %v1520 = vsel %vm1449, %v1519, %v1518
      %v1521 = vrot.slane %v1316, 7
      %v1522 = vsel %vm1431, %v1521, %v1308
      %v1523 = vrot.slane %v1324, 6
      %v1524 = vsel %vm1434, %v1523, %v1522
      %v1525 = vrot.slane %v1332, 5
      %v1526 = vsel %vm1437, %v1525, %v1524
      %v1527 = vrot.slane %v1340, 4
      %v1528 = vsel %vm1440, %v1527, %v1526
      %v1529 = vrot.slane %v1348, 3
      %v1530 = vsel %vm1443, %v1529, %v1528
      %v1531 = vrot.slane %v1356, 2
      %v1532 = vsel %vm1446, %v1531, %v1530
      %v1533 = vrot.slane %v1364, 1
      %v1534 = vsel %vm1449, %v1533, %v1532
      %v1535 = vrot.slane %v1317, 7
      %v1536 = vsel %vm1431, %v1535, %v1309
      %v1537 = vrot.slane %v1325, 6
      %v1538 = vsel %vm1434, %v1537, %v1536
      %v1539 = vrot.slane %v1333, 5
      %v1540 = vsel %vm1437, %v1539, %v1538
      %v1541 = vrot.slane %v1341, 4
      %v1542 = vsel %vm1440, %v1541, %v1540
      %v1543 = vrot.slane %v1349, 3
      %v1544 = vsel %vm1443, %v1543, %v1542
      %v1545 = vrot.slane %v1357, 2
      %v1546 = vsel %vm1446, %v1545, %v1544
      %v1547 = vrot.slane %v1365, 1
      %v1548 = vsel %vm1449, %v1547, %v1546
      %v1557 = vadd.f32 %v1450, %v1464
      %v1558 = vadd.f32 %v1557, %v1478
      %v1559 = vadd.f32 %v1558, %v1492
      %v1560 = vadd.f32 %v1559, %v1506
      %v1561 = vadd.f32 %v1560, %v1520
      %v1562 = vadd.f32 %v1561, %v1534
      %v1563 = vadd.f32 %v1562, %v1548
      %1564 = vadd.xlane.f32.xlu0 %v1563
      %v1565 = vpop.xlane.xlu0 %1564
      %v1566 = vadd.f32 %v1173, %v1565
      %vm1567 = vcmask 7168
      %1568 = vst.msk [vmem:[#allocation2] sm:$0xff] %vm1567, %v1566
      %v1569 = vld [vmem:[#allocation3] sm:$0xff]
      %v1570 = vadd.f32 %v492, %v493
      %v1571 = vadd.f32 %v1570, %v494
      %v1572 = vadd.f32 %v1571, %v495
      %v1573 = vadd.f32 %v1572, %v496
      %v1574 = vadd.f32 %v1573, %v497
      %v1575 = vadd.f32 %v1574, %v498
      %v1576 = vadd.f32 %v1575, %v499
      %1577 = vadd.xlane.f32.xlu0 %v1576
      %v1578 = vpop.xlane.xlu0 %1577
      %v1579 = vadd.f32 %v1569, %v1578
      %1580 = vst.msk [vmem:[#allocation3] sm:$0xff] %vm1567, %v1579
      %v1581 = vld [vmem:[%s478] sm:$0xff]
      %v1582 = vld [vmem:[%s478 + $0x8] sm:$0xff]
      %v1583 = vld [vmem:[%s478 + $0x10] sm:$0xff]
      %v1584 = vld [vmem:[%s478 + $0x18] sm:$0xff]
      %v1585 = vld [vmem:[%s478 + $0x20] sm:$0xff]
      %v1586 = vld [vmem:[%s478 + $0x28] sm:$0xff]
      %v1587 = vld [vmem:[%s478 + $0x30] sm:$0xff]
      %v1588 = vld [vmem:[%s478 + $0x38] sm:$0xff]
      %vm1589 = vcmp.gt.f32.partialorder %v492, 0.5
      %vm1590 = vcmp.gt.f32.partialorder %v493, 0.5
      %vm1591 = vcmp.gt.f32.partialorder %v494, 0.5
      %vm1592 = vcmp.gt.f32.partialorder %v495, 0.5
      %vm1593 = vcmp.gt.f32.partialorder %v496, 0.5
      %vm1594 = vcmp.gt.f32.partialorder %v497, 0.5
      %vm1595 = vcmp.gt.f32.partialorder %v498, 0.5
      %vm1596 = vcmp.gt.f32.partialorder %v499, 0.5
      %v1597 = vmin.f32 %v1581, 1.0
      %v1598 = vmin.f32 %v1582, 1.0
      %v1599 = vmin.f32 %v1583, 1.0
      %v1600 = vmin.f32 %v1584, 1.0
      %v1601 = vmin.f32 %v1585, 1.0
      %v1602 = vmin.f32 %v1586, 1.0
      %v1603 = vmin.f32 %v1587, 1.0
      %v1604 = vmin.f32 %v1588, 1.0
      %v1605 = vmax.f32 %v1581, 0.0
      %v1606 = vmax.f32 %v1582, 0.0
      %v1607 = vmax.f32 %v1583, 0.0
      %v1608 = vmax.f32 %v1584, 0.0
      %v1609 = vmax.f32 %v1585, 0.0
      %v1610 = vmax.f32 %v1586, 0.0
      %v1611 = vmax.f32 %v1587, 0.0
      %v1612 = vmax.f32 %v1588, 0.0
      %v1613 = vsel %vm1589, %v1597, %v1605
      %v1614 = vsel %vm1590, %v1598, %v1606
      %v1615 = vsel %vm1591, %v1599, %v1607
      %v1616 = vsel %vm1592, %v1600, %v1608
      %v1617 = vsel %vm1593, %v1601, %v1609
      %v1618 = vsel %vm1594, %v1602, %v1610
      %v1619 = vsel %vm1595, %v1603, %v1611
      %v1620 = vsel %vm1596, %v1604, %v1612
      %v1621 = vld [vmem:[#allocation4] sm:$0xff]
      %v1622 = vsub.f32 %v1613, %v492
      %v1623 = vsub.f32 %v1614, %v493
      %v1624 = vsub.f32 %v1615, %v494
      %v1625 = vsub.f32 %v1616, %v495
      %v1626 = vsub.f32 %v1617, %v496
      %v1627 = vsub.f32 %v1618, %v497
      %v1628 = vsub.f32 %v1619, %v498
      %v1629 = vsub.f32 %v1620, %v499
      %v1630 = vand.u32 2147483647, %v1622
      %v1631 = vand.u32 2147483647, %v1623
      %v1632 = vand.u32 2147483647, %v1624
      %v1633 = vand.u32 2147483647, %v1625
      %v1634 = vand.u32 2147483647, %v1626
      %v1635 = vand.u32 2147483647, %v1627
      %v1636 = vand.u32 2147483647, %v1628
      %v1637 = vand.u32 2147483647, %v1629
      %v1638 = vadd.f32 %v1630, %v1631
      %v1639 = vadd.f32 %v1638, %v1632
      %v1640 = vadd.f32 %v1639, %v1633
      %v1641 = vadd.f32 %v1640, %v1634
      %v1642 = vadd.f32 %v1641, %v1635
      %v1643 = vadd.f32 %v1642, %v1636
      %v1644 = vadd.f32 %v1643, %v1637
      %1645 = vadd.xlane.f32.xlu0 %v1644
      %v1646 = vpop.xlane.xlu0 %1645
      %v1647 = vadd.f32 %v1621, %v1646
      %1648 = vst.msk [vmem:[#allocation4] sm:$0xff] %vm1567, %v1647
      // Predicated region
      $region53: #{tpu_custom_call.1} parent=47 // pred_check
        %p1649 = pneg %p484
      $region54: #{tpu_custom_call.1} parent=47 // pred_check_branch
        %1651 = sbr.rel (%p1649) target = $region56
      $region55: #{tpu_custom_call.1} parent=47 // pred_region
        %v1652 = vld [vmem:[%s424] sm:$0x7]
        %v1653 = vld [vmem:[%s424 + $0x4] sm:$0x7]
        %v1654 = vld [vmem:[%s424 + $0x8] sm:$0x7]
        %v1655 = vld [vmem:[%s424 + $0xc] sm:$0x7]
        %v1656 = vld [vmem:[%s424 + $0x10] sm:$0x7]
        %v1657 = vld [vmem:[%s424 + $0x14] sm:$0x7]
        %v1658 = vld [vmem:[%s424 + $0x18] sm:$0x7]
        %v1659 = vld [vmem:[%s424 + $0x1c] sm:$0x7]
        %1668 = vrot.lane.b32.xlu0 %v1652, 125
        %v1669 = vpop.permute.xlu0 %1668
        %1670 = vrot.lane.b32.xlu0 %v1653, 125
        %v1671 = vpop.permute.xlu0 %1670
        %1672 = vrot.lane.b32.xlu0 %v1654, 125
        %v1673 = vpop.permute.xlu0 %1672
        %1674 = vrot.lane.b32.xlu0 %v1655, 125
        %v1675 = vpop.permute.xlu0 %1674
        %1676 = vrot.lane.b32.xlu0 %v1656, 125
        %v1677 = vpop.permute.xlu0 %1676
        %1678 = vrot.lane.b32.xlu0 %v1657, 125
        %v1679 = vpop.permute.xlu0 %1678
        %1680 = vrot.lane.b32.xlu0 %v1658, 125
        %v1681 = vpop.permute.xlu0 %1680
        %1682 = vrot.lane.b32.xlu0 %v1659, 125
        %v1683 = vpop.permute.xlu0 %1682
        %v1692 = vsub.f32 %v1652, %v1669
        %v1693 = vsub.f32 %v1653, %v1671
        %v1694 = vsub.f32 %v1654, %v1673
        %v1695 = vsub.f32 %v1655, %v1675
        %v1696 = vsub.f32 %v1656, %v1677
        %v1697 = vsub.f32 %v1657, %v1679
        %v1698 = vsub.f32 %v1658, %v1681
        %v1699 = vsub.f32 %v1659, %v1683
        %v1700 = vld [vmem:[%s434] sm:$0x7]
        %v1701 = vld [vmem:[%s434 + $0x4] sm:$0x7]
        %v1702 = vld [vmem:[%s434 + $0x8] sm:$0x7]
        %v1703 = vld [vmem:[%s434 + $0xc] sm:$0x7]
        %v1704 = vld [vmem:[%s434 + $0x10] sm:$0x7]
        %v1705 = vld [vmem:[%s434 + $0x14] sm:$0x7]
        %v1706 = vld [vmem:[%s434 + $0x18] sm:$0x7]
        %v1707 = vld [vmem:[%s434 + $0x1c] sm:$0x7]
        %1709 = vset.pattern.permute.xlu0 0
        %1710 = vperm.xlu0 %1709, %v1692
        %v1711 = vpop.permute.xlu0 %1710
        %1714 = vset.pattern.permute.xlu0 0
        %1715 = vperm.xlu0 %1714, %v1693
        %v1716 = vpop.permute.xlu0 %1715
        %1719 = vset.pattern.permute.xlu0 0
        %1720 = vperm.xlu0 %1719, %v1694
        %v1721 = vpop.permute.xlu0 %1720
        %1724 = vset.pattern.permute.xlu0 0
        %1725 = vperm.xlu0 %1724, %v1695
        %v1726 = vpop.permute.xlu0 %1725
        %1729 = vset.pattern.permute.xlu0 0
        %1730 = vperm.xlu0 %1729, %v1696
        %v1731 = vpop.permute.xlu0 %1730
        %1734 = vset.pattern.permute.xlu0 0
        %1735 = vperm.xlu0 %1734, %v1697
        %v1736 = vpop.permute.xlu0 %1735
        %1739 = vset.pattern.permute.xlu0 0
        %1740 = vperm.xlu0 %1739, %v1698
        %v1741 = vpop.permute.xlu0 %1740
        %1744 = vset.pattern.permute.xlu0 0
        %1745 = vperm.xlu0 %1744, %v1699
        %v1746 = vpop.permute.xlu0 %1745
        %v1748 = vlaneseq
        %v1749 = vshrl.u32 %v1748, 7
        %v1750 = vsub.s32 0, %v1749
        %v1751 = vrot.slane %v1700, %v1750
        %v1752 = vlaneseq
        %v1753 = vshrl.u32 %v1752, 7
        %v1754 = vsub.s32 0, %v1753
        %v1755 = vrot.slane %v1701, %v1754
        %v1756 = vlaneseq
        %v1757 = vshrl.u32 %v1756, 7
        %v1758 = vsub.s32 0, %v1757
        %v1759 = vrot.slane %v1702, %v1758
        %v1760 = vlaneseq
        %v1761 = vshrl.u32 %v1760, 7
        %v1762 = vsub.s32 0, %v1761
        %v1763 = vrot.slane %v1703, %v1762
        %v1764 = vlaneseq
        %v1765 = vshrl.u32 %v1764, 7
        %v1766 = vsub.s32 0, %v1765
        %v1767 = vrot.slane %v1704, %v1766
        %v1768 = vlaneseq
        %v1769 = vshrl.u32 %v1768, 7
        %v1770 = vsub.s32 0, %v1769
        %v1771 = vrot.slane %v1705, %v1770
        %v1772 = vlaneseq
        %v1773 = vshrl.u32 %v1772, 7
        %v1774 = vsub.s32 0, %v1773
        %v1775 = vrot.slane %v1706, %v1774
        %v1776 = vlaneseq
        %v1777 = vshrl.u32 %v1776, 7
        %v1778 = vsub.s32 0, %v1777
        %v1779 = vrot.slane %v1707, %v1778
        %v1780 = vmul.f32 %v1711, %v1751
        %v1781 = vmul.f32 %v1716, %v1755
        %v1782 = vmul.f32 %v1721, %v1759
        %v1783 = vmul.f32 %v1726, %v1763
        %v1784 = vmul.f32 %v1731, %v1767
        %v1785 = vmul.f32 %v1736, %v1771
        %v1786 = vmul.f32 %v1741, %v1775
        %v1787 = vmul.f32 %v1746, %v1779
        %1788 = vset.pattern.permute.xlu0 1
        %1789 = vperm.xlu0 %1788, %v1692
        %v1790 = vpop.permute.xlu0 %1789
        %1792 = vset.pattern.permute.xlu0 1
        %1793 = vperm.xlu0 %1792, %v1693
        %v1794 = vpop.permute.xlu0 %1793
        %1796 = vset.pattern.permute.xlu0 1
        %1797 = vperm.xlu0 %1796, %v1694
        %v1798 = vpop.permute.xlu0 %1797
        %1800 = vset.pattern.permute.xlu0 1
        %1801 = vperm.xlu0 %1800, %v1695
        %v1802 = vpop.permute.xlu0 %1801
        %1804 = vset.pattern.permute.xlu0 1
        %1805 = vperm.xlu0 %1804, %v1696
        %v1806 = vpop.permute.xlu0 %1805
        %1808 = vset.pattern.permute.xlu0 1
        %1809 = vperm.xlu0 %1808, %v1697
        %v1810 = vpop.permute.xlu0 %1809
        %1812 = vset.pattern.permute.xlu0 1
        %1813 = vperm.xlu0 %1812, %v1698
        %v1814 = vpop.permute.xlu0 %1813
        %1816 = vset.pattern.permute.xlu0 1
        %1817 = vperm.xlu0 %1816, %v1699
        %v1818 = vpop.permute.xlu0 %1817
        %v1820 = vlaneseq
        %v1821 = vshrl.u32 %v1820, 7
        %v1822 = vsub.s32 1, %v1821
        %v1823 = vrot.slane %v1700, %v1822
        %v1824 = vlaneseq
        %v1825 = vshrl.u32 %v1824, 7
        %v1826 = vsub.s32 1, %v1825
        %v1827 = vrot.slane %v1701, %v1826
        %v1828 = vlaneseq
        %v1829 = vshrl.u32 %v1828, 7
        %v1830 = vsub.s32 1, %v1829
        %v1831 = vrot.slane %v1702, %v1830
        %v1832 = vlaneseq
        %v1833 = vshrl.u32 %v1832, 7
        %v1834 = vsub.s32 1, %v1833
        %v1835 = vrot.slane %v1703, %v1834
        %v1836 = vlaneseq
        %v1837 = vshrl.u32 %v1836, 7
        %v1838 = vsub.s32 1, %v1837
        %v1839 = vrot.slane %v1704, %v1838
        %v1840 = vlaneseq
        %v1841 = vshrl.u32 %v1840, 7
        %v1842 = vsub.s32 1, %v1841
        %v1843 = vrot.slane %v1705, %v1842
        %v1844 = vlaneseq
        %v1845 = vshrl.u32 %v1844, 7
        %v1846 = vsub.s32 1, %v1845
        %v1847 = vrot.slane %v1706, %v1846
        %v1848 = vlaneseq
        %v1849 = vshrl.u32 %v1848, 7
        %v1850 = vsub.s32 1, %v1849
        %v1851 = vrot.slane %v1707, %v1850
        %v1852 = vmul.f32 %v1790, %v1823
        %v1853 = vmul.f32 %v1794, %v1827
        %v1854 = vmul.f32 %v1798, %v1831
        %v1855 = vmul.f32 %v1802, %v1835
        %v1856 = vmul.f32 %v1806, %v1839
        %v1857 = vmul.f32 %v1810, %v1843
        %v1858 = vmul.f32 %v1814, %v1847
        %v1859 = vmul.f32 %v1818, %v1851
        %v1860 = vadd.f32 %v1780, %v1852
        %v1861 = vadd.f32 %v1781, %v1853
        %v1862 = vadd.f32 %v1782, %v1854
        %v1863 = vadd.f32 %v1783, %v1855
        %v1864 = vadd.f32 %v1784, %v1856
        %v1865 = vadd.f32 %v1785, %v1857
        %v1866 = vadd.f32 %v1786, %v1858
        %v1867 = vadd.f32 %v1787, %v1859
        %1868 = vset.pattern.permute.xlu0 2
        %1869 = vperm.xlu0 %1868, %v1692
        %v1870 = vpop.permute.xlu0 %1869
        %1872 = vset.pattern.permute.xlu0 2
        %1873 = vperm.xlu0 %1872, %v1693
        %v1874 = vpop.permute.xlu0 %1873
        %1876 = vset.pattern.permute.xlu0 2
        %1877 = vperm.xlu0 %1876, %v1694
        %v1878 = vpop.permute.xlu0 %1877
        %1880 = vset.pattern.permute.xlu0 2
        %1881 = vperm.xlu0 %1880, %v1695
        %v1882 = vpop.permute.xlu0 %1881
        %1884 = vset.pattern.permute.xlu0 2
        %1885 = vperm.xlu0 %1884, %v1696
        %v1886 = vpop.permute.xlu0 %1885
        %1888 = vset.pattern.permute.xlu0 2
        %1889 = vperm.xlu0 %1888, %v1697
        %v1890 = vpop.permute.xlu0 %1889
        %1892 = vset.pattern.permute.xlu0 2
        %1893 = vperm.xlu0 %1892, %v1698
        %v1894 = vpop.permute.xlu0 %1893
        %1896 = vset.pattern.permute.xlu0 2
        %1897 = vperm.xlu0 %1896, %v1699
        %v1898 = vpop.permute.xlu0 %1897
        %v1900 = vlaneseq
        %v1901 = vshrl.u32 %v1900, 7
        %v1902 = vsub.s32 2, %v1901
        %v1903 = vrot.slane %v1700, %v1902
        %v1904 = vlaneseq
        %v1905 = vshrl.u32 %v1904, 7
        %v1906 = vsub.s32 2, %v1905
        %v1907 = vrot.slane %v1701, %v1906
        %v1908 = vlaneseq
        %v1909 = vshrl.u32 %v1908, 7
        %v1910 = vsub.s32 2, %v1909
        %v1911 = vrot.slane %v1702, %v1910
        %v1912 = vlaneseq
        %v1913 = vshrl.u32 %v1912, 7
        %v1914 = vsub.s32 2, %v1913
        %v1915 = vrot.slane %v1703, %v1914
        %v1916 = vlaneseq
        %v1917 = vshrl.u32 %v1916, 7
        %v1918 = vsub.s32 2, %v1917
        %v1919 = vrot.slane %v1704, %v1918
        %v1920 = vlaneseq
        %v1921 = vshrl.u32 %v1920, 7
        %v1922 = vsub.s32 2, %v1921
        %v1923 = vrot.slane %v1705, %v1922
        %v1924 = vlaneseq
        %v1925 = vshrl.u32 %v1924, 7
        %v1926 = vsub.s32 2, %v1925
        %v1927 = vrot.slane %v1706, %v1926
        %v1928 = vlaneseq
        %v1929 = vshrl.u32 %v1928, 7
        %v1930 = vsub.s32 2, %v1929
        %v1931 = vrot.slane %v1707, %v1930
        %v1932 = vmul.f32 %v1870, %v1903
        %v1933 = vmul.f32 %v1874, %v1907
        %v1934 = vmul.f32 %v1878, %v1911
        %v1935 = vmul.f32 %v1882, %v1915
        %v1936 = vmul.f32 %v1886, %v1919
        %v1937 = vmul.f32 %v1890, %v1923
        %v1938 = vmul.f32 %v1894, %v1927
        %v1939 = vmul.f32 %v1898, %v1931
        %v1940 = vadd.f32 %v1860, %v1932
        %v1941 = vadd.f32 %v1861, %v1933
        %v1942 = vadd.f32 %v1862, %v1934
        %v1943 = vadd.f32 %v1863, %v1935
        %v1944 = vadd.f32 %v1864, %v1936
        %v1945 = vadd.f32 %v1865, %v1937
        %v1946 = vadd.f32 %v1866, %v1938
        %v1947 = vadd.f32 %v1867, %v1939
        %v1948 = vand.u32 2147483647, %v1940
        %v1949 = vand.u32 2147483647, %v1941
        %v1950 = vand.u32 2147483647, %v1942
        %v1951 = vand.u32 2147483647, %v1943
        %v1952 = vand.u32 2147483647, %v1944
        %v1953 = vand.u32 2147483647, %v1945
        %v1954 = vand.u32 2147483647, %v1946
        %v1955 = vand.u32 2147483647, %v1947
        %v1956 = vsel %vm724, %v1948, 0.0
        %v1957 = vrot.slane %v1956, 4
        %v1958 = vadd.f32 %v1956, %v1957
        %v1959 = vrot.slane %v1958, 2
        %v1960 = vadd.f32 %v1958, %v1959
        %v1961 = vrot.slane %v1960, 1
        %v1962 = vadd.f32 %v1960, %v1961
        %v1963 = vsel %vm724, %v1949, 0.0
        %v1964 = vrot.slane %v1963, 4
        %v1965 = vadd.f32 %v1963, %v1964
        %v1966 = vrot.slane %v1965, 2
        %v1967 = vadd.f32 %v1965, %v1966
        %v1968 = vrot.slane %v1967, 1
        %v1969 = vadd.f32 %v1967, %v1968
        %v1970 = vsel %vm724, %v1950, 0.0
        %v1971 = vrot.slane %v1970, 4
        %v1972 = vadd.f32 %v1970, %v1971
        %v1973 = vrot.slane %v1972, 2
        %v1974 = vadd.f32 %v1972, %v1973
        %v1975 = vrot.slane %v1974, 1
        %v1976 = vadd.f32 %v1974, %v1975
        %v1977 = vsel %vm724, %v1951, 0.0
        %v1978 = vrot.slane %v1977, 4
        %v1979 = vadd.f32 %v1977, %v1978
        %v1980 = vrot.slane %v1979, 2
        %v1981 = vadd.f32 %v1979, %v1980
        %v1982 = vrot.slane %v1981, 1
        %v1983 = vadd.f32 %v1981, %v1982
        %v1984 = vsel %vm724, %v1952, 0.0
        %v1985 = vrot.slane %v1984, 4
        %v1986 = vadd.f32 %v1984, %v1985
        %v1987 = vrot.slane %v1986, 2
        %v1988 = vadd.f32 %v1986, %v1987
        %v1989 = vrot.slane %v1988, 1
        %v1990 = vadd.f32 %v1988, %v1989
        %v1991 = vsel %vm724, %v1953, 0.0
        %v1992 = vrot.slane %v1991, 4
        %v1993 = vadd.f32 %v1991, %v1992
        %v1994 = vrot.slane %v1993, 2
        %v1995 = vadd.f32 %v1993, %v1994
        %v1996 = vrot.slane %v1995, 1
        %v1997 = vadd.f32 %v1995, %v1996
        %v1998 = vsel %vm724, %v1954, 0.0
        %v1999 = vrot.slane %v1998, 4
        %v2000 = vadd.f32 %v1998, %v1999
        %v2001 = vrot.slane %v2000, 2
        %v2002 = vadd.f32 %v2000, %v2001
        %v2003 = vrot.slane %v2002, 1
        %v2004 = vadd.f32 %v2002, %v2003
        %v2005 = vsel %vm724, %v1955, 0.0
        %v2006 = vrot.slane %v2005, 4
        %v2007 = vadd.f32 %v2005, %v2006
        %v2008 = vrot.slane %v2007, 2
        %v2009 = vadd.f32 %v2007, %v2008
        %v2010 = vrot.slane %v2009, 1
        %v2011 = vadd.f32 %v2009, %v2010
        %v2012 = vld [vmem:[%s429] sm:$0xff]
        %v2021 = vsel %vm1431, %v1969, %v1962
        %v2022 = vsel %vm1434, %v1976, %v2021
        %v2023 = vsel %vm1437, %v1983, %v2022
        %v2024 = vsel %vm1440, %v1990, %v2023
        %v2025 = vsel %vm1443, %v1997, %v2024
        %v2026 = vsel %vm1446, %v2004, %v2025
        %v2027 = vsel %vm1449, %v2011, %v2026
        %2029 = vadd.xlane.f32.xlu0 %v2027
        %v2030 = vpop.xlane.xlu0 %2029
        %v2031 = vrcp.pop 128.0
        %v2032 = vmul.f32 %v2030, %v2031
        %v2033 = vmul.f32 %v2032, %v2012
        %2035 = vrot.lane.b32.xlu0 %v2012, 125
        %v2036 = vpop.permute.xlu0 %2035
        %v2038 = vsub.f32 %v2012, %v2036
        %v2039 = vand.u32 2147483647, %v2038
        %2041 = vrot.lane.b32.xlu0 %v2039, 127
        %v2042 = vpop.permute.xlu0 %2041
        %v2044 = vadd.f32 %v2039, %v2042
        %v2045 = vld [vmem:[#allocation2] sm:$0xff]
        %v2046 = vld [vmem:[#allocation3] sm:$0xff]
        %v2047 = vrcp.pop %v2046
        %v2048 = vmul.f32 %v2045, %v2047
        %v2049 = vld [vmem:[#allocation4] sm:$0xff]
        %v2050 = vmul.f32 %v2049, 0.0009765625
        %2052 = vrot.lane.b32.xlu0 %v2033, 122
        %v2053 = vpop.permute.xlu0 %2052
        %2055 = vst.msk [vmem:[%s483] sm:$0xff] %vm1567, %v2053
        %2057 = vrot.lane.b32.xlu0 %v2044, 1
        %v2058 = vpop.permute.xlu0 %2057
        %vm2060 = vcmask 15368
        %2061 = vst.msk [vmem:[%s483] sm:$0xff] %vm2060, %v2058
        %vm2062 = vcmask 23568
        %2063 = vst.msk [vmem:[%s483] sm:$0xff] %vm2062, %v2039
        %2065 = vrot.lane.b32.xlu0 %v2048, 3
        %v2066 = vpop.permute.xlu0 %2065
        %vm2068 = vcmask 31768
        %2069 = vst.msk [vmem:[%s483] sm:$0xff] %vm2068, %v2066
        %2071 = vrot.lane.b32.xlu0 %v2050, 4
        %v2072 = vpop.permute.xlu0 %2071
        %vm2074 = vcmask 39968
        %2075 = vst.msk [vmem:[%s483] sm:$0xff] %vm2074, %v2072
        %vm2076 = vcmask 64552
        %2077 = vst.msk [vmem:[%s483] sm:$0xff] %vm2076, 0.0
      $region56: #{tpu_custom_call.1} parent=47 // pred_fallthru
        _
      %p2078 = scmp.lt.s32.totalorder %s22, 1
      %s2079 = scalar_select %p2078, %s22, 1
      %s2080 = smul.addr %s2079, 8
      %s2081 = scalar_lea.vmem %s7, %s2080
      // Predicated region
      $region57: #{tpu_custom_call.1} parent=47 // pred_check
        %p2082 = pneg %p238
      $region58: #{tpu_custom_call.1} parent=47 // pred_check_branch
        %2084 = sbr.rel (%p2082) target = $region60
      $region59: #{tpu_custom_call.1} parent=47 // pred_region
        _
      $region60: #{tpu_custom_call.1} parent=47 // pred_fallthru
        _
    $region48: #{tpu_custom_call.1} parent=5 // pred_fallthru
      _
    %p2085 = scmp.le.s32.totalorder 2, %s13
    // Predicated region
    $region61: #{tpu_custom_call.1} parent=5 // pred_check
      %p2086 = pneg %p2085
    $region62: #{tpu_custom_call.1} parent=5 // pred_check_branch
      %2088 = sbr.rel (%p2086) target = $region64
    $region63: #{tpu_custom_call.1} parent=5 // pred_region
      %s2089 = ssub.s32 %s13, 2
      // Predicated region
      $region65: #{tpu_custom_call.1} parent=63 // pred_check
        %p2090 = pneg %p244
      $region66: #{tpu_custom_call.1} parent=63 // pred_check_branch
        %2092 = sbr.rel (%p2090) target = $region68
      $region67: #{tpu_custom_call.1} parent=63 // pred_region
        %p2093 = scmp.lt.s32.totalorder %s24, 1
        %s2094 = scalar_select %p2093, %s24, 1
        %s2095 = smul.addr %s2094, 8
        %s2096 = scalar_lea.vmem %s7, %s2095
      $region68: #{tpu_custom_call.1} parent=63 // pred_fallthru
        _
    $region64: #{tpu_custom_call.1} parent=5 // pred_fallthru
      _
  $region6: #{tpu_custom_call.1} parent=0 // loop_footer
    %s17 = sadd.s32 1, %s13
  $region7: #{tpu_custom_call.1} parent=0 // loop_footer_branch
    %12 = sbr.rel target = $region3
  $region8: #{tpu_custom_call.1} parent=0 // loop_exit
    _

</llo_original>
